<compile_context>
chip_gen: v7x
topology: tpu7x:2x2x1
jax: 0.10.0
libtpu: 0.0.40
codegen_flags: <defaults>
</compile_context>

<pallas_src>
import math
import functools

import jax
import jax.numpy as jnp
from jax.experimental import pallas as pl
from jax.experimental.pallas import tpu as pltpu

NEG_INF = -1e30  # large-negative stand-in for float('-inf') additive masking


# --------------------------- in-kernel helpers -------------------------------

def _layernorm(h, g, b):
    # PyTorch LayerNorm semantics: biased variance, eps=1e-5, f32 math.
    mean = jnp.mean(h, axis=-1, keepdims=True)
    var = jnp.mean(jnp.square(h - mean), axis=-1, keepdims=True)
    return (h - mean) * jax.lax.rsqrt(var + 1e-5) * g + b


def _softmax_rows(s):
    # numerically stable softmax along the last axis, f32 stats,
    # EUP approx-reciprocal instead of a VALU divide.
    s = s - jnp.max(s, axis=-1, keepdims=True)
    p = jnp.exp(s)
    return p * pl.reciprocal(jnp.sum(p, axis=-1, keepdims=True), approx=True)


def _mha_self(x, bias, wqkv_ref, bqkv_ref, wo_ref, bo_ref, n_heads):
    """Fused QKV projection + per-head attention + out-projection.

    x: (S, D) f32; bias: additive f32 mask broadcastable to (S, S);
    wqkv: (D, 3D) bf16; wo: (H, Dh, D) bf16.  Returns (S, D) f32 (pre-residual).
    """
    S, D = x.shape
    H = n_heads
    Dh = D // H
    scale = 1.0 / math.sqrt(Dh)

    qkv = jnp.dot(x.astype(jnp.bfloat16), wqkv_ref[...],
                  preferred_element_type=jnp.float32) + bqkv_ref[...]

    out = jnp.zeros((S, D), jnp.float32)
    for hi in range(H):  # static, tiny H; per-head dot + fused out-proj slice
        qh = qkv[:, hi * Dh:(hi + 1) * Dh]
        kh = qkv[:, D + hi * Dh:D + (hi + 1) * Dh]
        vh = qkv[:, 2 * D + hi * Dh:2 * D + (hi + 1) * Dh]
        s = jnp.dot(qh.astype(jnp.bfloat16), kh.T.astype(jnp.bfloat16),
                    preferred_element_type=jnp.float32) * scale + bias
        p = _softmax_rows(s)
        oh = jnp.dot(p.astype(jnp.bfloat16), vh.astype(jnp.bfloat16),
                     preferred_element_type=jnp.float32)          # (S, Dh)
        out = out + jnp.dot(oh.astype(jnp.bfloat16), wo_ref[hi],
                            preferred_element_type=jnp.float32)   # (S, D)
    return out + bo_ref[...]


def _mha_cross(y, mem, wq_ref, bq_ref, wkv_ref, bkv_ref, wo_ref, bo_ref, n_heads):
    """Cross-attention: queries from y (St, D), fused K|V from mem (Ss, D).
    Unmasked (matches nn.TransformerDecoder with memory_mask=None)."""
    Sq, D = y.shape
    H = n_heads
    Dh = D // H
    scale = 1.0 / math.sqrt(Dh)

    q = jnp.dot(y.astype(jnp.bfloat16), wq_ref[...],
                preferred_element_type=jnp.float32) + bq_ref[...]
    kv = jnp.dot(mem.astype(jnp.bfloat16), wkv_ref[...],
                 preferred_element_type=jnp.float32) + bkv_ref[...]

    out = jnp.zeros((Sq, D), jnp.float32)
    for hi in range(H):
        qh = q[:, hi * Dh:(hi + 1) * Dh]
        kh = kv[:, hi * Dh:(hi + 1) * Dh]
        vh = kv[:, D + hi * Dh:D + (hi + 1) * Dh]
        s = jnp.dot(qh.astype(jnp.bfloat16), kh.T.astype(jnp.bfloat16),
                    preferred_element_type=jnp.float32) * scale
        p = _softmax_rows(s)
        oh = jnp.dot(p.astype(jnp.bfloat16), vh.astype(jnp.bfloat16),
                     preferred_element_type=jnp.float32)
        out = out + jnp.dot(oh.astype(jnp.bfloat16), wo_ref[hi],
                            preferred_element_type=jnp.float32)
    return out + bo_ref[...]


def _ffn(x, w1_ref, b1_ref, w2_ref, b2_ref):
    h = jnp.dot(x.astype(jnp.bfloat16), w1_ref[...],
                preferred_element_type=jnp.float32) + b1_ref[...]
    h = jnp.maximum(h, 0.0)
    return jnp.dot(h.astype(jnp.bfloat16), w2_ref[...],
                   preferred_element_type=jnp.float32) + b2_ref[...]


# ------------------------------ fused kernels --------------------------------

def _encoder_layer_kernel(x_ref, bias_ref,
                          wqkv_ref, bqkv_ref, wo_ref, bo_ref, g1_ref, be1_ref,
                          w1_ref, bf1_ref, w2_ref, bf2_ref, g2_ref, be2_ref,
                          o_ref, *, n_heads):
    x = x_ref[0]                 # (Ss, D) f32
    bias = bias_ref[0]           # (1, Ss) additive key-padding bias

    attn = _mha_self(x, bias, wqkv_ref, bqkv_ref, wo_ref, bo_ref, n_heads)
    x = _layernorm(x + attn, g1_ref[...], be1_ref[...])
    ff = _ffn(x, w1_ref, bf1_ref, w2_ref, bf2_ref)
    x = _layernorm(x + ff, g2_ref[...], be2_ref[...])
    o_ref[0] = x.astype(o_ref.dtype)


def _decoder_layer_kernel(y_ref, mem_ref,
                          wqkv_s_ref, bqkv_s_ref, wo_s_ref, bo_s_ref, g1_ref, be1_ref,
                          wq_c_ref, bq_c_ref, wkv_c_ref, bkv_c_ref, wo_c_ref, bo_c_ref,
                          g2_ref, be2_ref,
                          w1_ref, bf1_ref, w2_ref, bf2_ref, g3_ref, be3_ref,
                          o_ref, *, n_heads):
    y = y_ref[0]                 # (St, D) f32
    mem = mem_ref[0]             # (Ss, D) f32
    St = y.shape[0]

    # causal additive mask built in-kernel (generate_square_subsequent_mask)
    rows = jax.lax.broadcasted_iota(jnp.int32, (St, St), 0)
    cols = jax.lax.broadcasted_iota(jnp.int32, (St, St), 1)
    causal = jnp.where(rows >= cols, 0.0, NEG_INF).astype(jnp.float32)

    sa = _mha_self(y, causal, wqkv_s_ref, bqkv_s_ref, wo_s_ref, bo_s_ref, n_heads)
    y = _layernorm(y + sa, g1_ref[...], be1_ref[...])
    ca = _mha_cross(y, mem, wq_c_ref, bq_c_ref, wkv_c_ref, bkv_c_ref,
                    wo_c_ref, bo_c_ref, n_heads)
    y = _layernorm(y + ca, g2_ref[...], be2_ref[...])
    ff = _ffn(y, w1_ref, bf1_ref, w2_ref, bf2_ref)
    y = _layernorm(y + ff, g3_ref[...], be3_ref[...])
    o_ref[0] = y.astype(o_ref.dtype)


def _head_kernel(y_ref, w_ref, b_ref, o_ref):
    y = jnp.dot(y_ref[0].astype(jnp.bfloat16), w_ref[...],
                preferred_element_type=jnp.float32) + b_ref[...]
    o_ref[0] = y.astype(o_ref.dtype)


# ------------------------------ wrappers --------------------------------------

def _const_index(ndim):
    return lambda b: (0,) * ndim


def _weight_specs(arrays):
    return [pl.BlockSpec(a.shape, _const_index(a.ndim)) for a in arrays]


def encoder_layer(x, pad_bias, p, n_heads):
    B, S, D = x.shape
    sa, ff = p["self_attn"], p["ffn"]
    weights = [sa["wqkv"], sa["bqkv"], sa["wo"], sa["bo"],
               p["ln1"]["g"], p["ln1"]["b"],
               ff["w1"], ff["b1"], ff["w2"], ff["b2"],
               p["ln2"]["g"], p["ln2"]["b"]]
    return pl.pallas_call(
        functools.partial(_encoder_layer_kernel, n_heads=n_heads),
        out_shape=jax.ShapeDtypeStruct((B, S, D), jnp.float32),
        grid=(B,),
        in_specs=[pl.BlockSpec((1, S, D), lambda b: (b, 0, 0)),
                  pl.BlockSpec((1, 1, S), lambda b: (b, 0, 0))]
                 + _weight_specs(weights),
        out_specs=pl.BlockSpec((1, S, D), lambda b: (b, 0, 0)),
        compiler_params=pltpu.CompilerParams(dimension_semantics=("parallel",)),
    )(x, pad_bias, *weights)


def decoder_layer(y, memory, p, n_heads):
    B, St, D = y.shape
    Ss = memory.shape[1]
    sa, ca, ff = p["self_attn"], p["cross_attn"], p["ffn"]
    weights = [sa["wqkv"], sa["bqkv"], sa["wo"], sa["bo"],
               p["ln1"]["g"], p["ln1"]["b"],
               ca["wq"], ca["bq"], ca["wkv"], ca["bkv"], ca["wo"], ca["bo"],
               p["ln2"]["g"], p["ln2"]["b"],
               ff["w1"], ff["b1"], ff["w2"], ff["b2"],
               p["ln3"]["g"], p["ln3"]["b"]]
    return pl.pallas_call(
        functools.partial(_decoder_layer_kernel, n_heads=n_heads),
        out_shape=jax.ShapeDtypeStruct((B, St, D), jnp.float32),
        grid=(B,),
        in_specs=[pl.BlockSpec((1, St, D), lambda b: (b, 0, 0)),
                  pl.BlockSpec((1, Ss, D), lambda b: (b, 0, 0))]
                 + _weight_specs(weights),
        out_specs=pl.BlockSpec((1, St, D), lambda b: (b, 0, 0)),
        compiler_params=pltpu.CompilerParams(dimension_semantics=("parallel",)),
    )(y, memory, *weights)


def output_head(y, w, b):
    B, S, D = y.shape
    V = w.shape[1]
    return pl.pallas_call(
        _head_kernel,
        out_shape=jax.ShapeDtypeStruct((B, S, V), jnp.float32),
        grid=(B,),
        in_specs=[pl.BlockSpec((1, S, D), lambda i: (i, 0, 0)),
                  pl.BlockSpec((D, V), lambda i: (0, 0)),
                  pl.BlockSpec((1, V), lambda i: (0, 0))],
        out_specs=pl.BlockSpec((1, S, V), lambda i: (i, 0, 0)),
        compiler_params=pltpu.CompilerParams(dimension_semantics=("parallel",)),
    )(y, w, b)


# ------------------------------ model glue ------------------------------------

def make_positional_encoding(max_len, d_model):
    position = jnp.arange(max_len, dtype=jnp.float32)[:, None]
    div_term = jnp.exp(jnp.arange(0, d_model, 2, dtype=jnp.float32)
                       * (-math.log(10000.0) / d_model))
    pe = jnp.zeros((max_len, d_model), jnp.float32)
    pe = pe.at[:, 0::2].set(jnp.sin(position * div_term))
    pe = pe.at[:, 1::2].set(jnp.cos(position * div_term))
    return pe


def init_params(key, src_vocab, tgt_vocab, d_model, n_heads, num_layers, d_ff,
                max_len=100):
    keys = iter(jax.random.split(key, 512))
    d_head = d_model // n_heads

    def w(shape):   # bf16 storage: MXU-operand format, halves HBM/VMEM bytes
        return (jax.random.normal(next(keys), shape, jnp.float32) * 0.05
                ).astype(jnp.bfloat16)

    def bias(n):
        return jnp.zeros((1, n), jnp.float32)

    def ln_p():
        return dict(g=jnp.ones((1, d_model), jnp.float32),
                    b=jnp.zeros((1, d_model), jnp.float32))

    def self_attn_p():   # fused Q|K|V weight; out-proj stored per-head (H, Dh, D)
        return dict(wqkv=w((d_model, 3 * d_model)), bqkv=bias(3 * d_model),
                    wo=w((n_heads, d_head, d_model)), bo=bias(d_model))

    def cross_attn_p():  # fused K|V weight
        return dict(wq=w((d_model, d_model)), bq=bias(d_model),
                    wkv=w((d_model, 2 * d_model)), bkv=bias(2 * d_model),
                    wo=w((n_heads, d_head, d_model)), bo=bias(d_model))

    def ffn_p():
        return dict(w1=w((d_model, d_ff)), b1=bias(d_ff),
                    w2=w((d_ff, d_model)), b2=bias(d_model))

    enc = [dict(self_attn=self_attn_p(), ffn=ffn_p(), ln1=ln_p(), ln2=ln_p())
           for _ in range(num_layers)]
    dec = [dict(self_attn=self_attn_p(), cross_attn=cross_attn_p(), ffn=ffn_p(),
                ln1=ln_p(), ln2=ln_p(), ln3=ln_p())
           for _ in range(num_layers)]

    return dict(src_emb=jax.random.normal(next(keys), (src_vocab, d_model),
                                          jnp.float32) * 0.05,
                tgt_emb=jax.random.normal(next(keys), (tgt_vocab, d_model),
                                          jnp.float32) * 0.05,
                pe=make_positional_encoding(max_len, d_model),
                encoder=enc, decoder=dec,
                w_out=w((d_model, tgt_vocab)), b_out=bias(tgt_vocab))


def transformer_forward(params, src, tgt, d_model, n_heads):
    B, Ss = src.shape
    _, St = tgt.shape
    pe = params["pe"]

    # embedding * sqrt(d_model) + positional encoding (plain-JAX glue)
    src_emb = params["src_emb"][src] * math.sqrt(d_model) + pe[:Ss][None]
    tgt_emb = params["tgt_emb"][tgt] * math.sqrt(d_model) + pe[:St][None]

    # encoder key-padding additive bias, tiny (B, 1, Ss); causal mask is built
    # in-kernel and the (all-zero) cross-attention mask is dropped entirely.
    pad_bias = jnp.where((src == 0)[:, None, :], NEG_INF, 0.0).astype(jnp.float32)

    x = src_emb.astype(jnp.float32)
    for lp in params["encoder"]:
        x = encoder_layer(x, pad_bias, lp, n_heads)
    memory = x

    y = tgt_emb.astype(jnp.float32)
    for lp in params["decoder"]:
        y = decoder_layer(y, memory, lp, n_heads)

    return output_head(y, params["w_out"], params["b_out"])


if __name__ == "__main__":
    # small shapes consistent with the module's forward
    B, Ss, St = 2, 8, 8
    d_model, n_heads, num_layers, d_ff = 32, 2, 2, 64
    src_vocab, tgt_vocab = 50, 40

    key = jax.random.PRNGKey(0)
    kp, ks, kt = jax.random.split(key, 3)
    params = init_params(kp, src_vocab, tgt_vocab, d_model, n_heads,
                         num_layers, d_ff)

    src = jax.random.randint(ks, (B, Ss), 1, src_vocab, dtype=jnp.int32)
    src = src.at[:, -2:].set(0)   # exercise the key-padding mask path
    tgt = jax.random.randint(kt, (B, St), 1, tgt_vocab, dtype=jnp.int32)

    out = transformer_forward(params, src, tgt, d_model, n_heads)
    out = jax.block_until_ready(out)
    assert out.shape == (B, St, tgt_vocab)
    assert bool(jnp.all(jnp.isfinite(out)))
    print("KERNEL_OK")
</pallas_src>

<mosaic_0001>
module attributes {stable_mosaic.version = 11 : i64} {
  func.func @_encoder_layer_kernel(%arg0: i32, %arg1: memref<1x8x32xf32, #tpu.memory_space<vmem>>, %arg2: memref<1x1x8xf32, #tpu.memory_space<vmem>>, %arg3: memref<32x96xbf16, #tpu.memory_space<vmem>>, %arg4: memref<1x96xf32, #tpu.memory_space<vmem>>, %arg5: memref<2x16x32xbf16, #tpu.memory_space<vmem>>, %arg6: memref<1x32xf32, #tpu.memory_space<vmem>>, %arg7: memref<1x32xf32, #tpu.memory_space<vmem>>, %arg8: memref<1x32xf32, #tpu.memory_space<vmem>>, %arg9: memref<32x64xbf16, #tpu.memory_space<vmem>>, %arg10: memref<1x64xf32, #tpu.memory_space<vmem>>, %arg11: memref<64x32xbf16, #tpu.memory_space<vmem>>, %arg12: memref<1x32xf32, #tpu.memory_space<vmem>>, %arg13: memref<1x32xf32, #tpu.memory_space<vmem>>, %arg14: memref<1x32xf32, #tpu.memory_space<vmem>>, %arg15: memref<1x8x32xf32, #tpu.memory_space<vmem>>) attributes {dimension_semantics = [#tpu.dimension_semantics<parallel>], iteration_bounds = array<i64: 2>, scalar_prefetch = 0 : i64, scratch_operands = 0 : i64, tpu.core_type = #tpu.core_type<tc>, window_params = [{transform_indices = @transform_0, window_bounds = array<i64: 1, 8, 32>}, {transform_indices = @transform_1, window_bounds = array<i64: 1, 1, 8>}, {pipeline_mode = #tpu.pipeline_mode<synchronous>, transform_indices = @transform_2, window_bounds = array<i64: 32, 96>}, {pipeline_mode = #tpu.pipeline_mode<synchronous>, transform_indices = @transform_3, window_bounds = array<i64: 1, 96>}, {pipeline_mode = #tpu.pipeline_mode<synchronous>, transform_indices = @transform_4, window_bounds = array<i64: 2, 16, 32>}, {pipeline_mode = #tpu.pipeline_mode<synchronous>, transform_indices = @transform_5, window_bounds = array<i64: 1, 32>}, {pipeline_mode = #tpu.pipeline_mode<synchronous>, transform_indices = @transform_6, window_bounds = array<i64: 1, 32>}, {pipeline_mode = #tpu.pipeline_mode<synchronous>, transform_indices = @transform_7, window_bounds = array<i64: 1, 32>}, {pipeline_mode = #tpu.pipeline_mode<synchronous>, transform_indices = @transform_8, window_bounds = array<i64: 32, 64>}, {pipeline_mode = #tpu.pipeline_mode<synchronous>, transform_indices = @transform_9, window_bounds = array<i64: 1, 64>}, {pipeline_mode = #tpu.pipeline_mode<synchronous>, transform_indices = @transform_10, window_bounds = array<i64: 64, 32>}, {pipeline_mode = #tpu.pipeline_mode<synchronous>, transform_indices = @transform_11, window_bounds = array<i64: 1, 32>}, {pipeline_mode = #tpu.pipeline_mode<synchronous>, transform_indices = @transform_12, window_bounds = array<i64: 1, 32>}, {pipeline_mode = #tpu.pipeline_mode<synchronous>, transform_indices = @transform_13, window_bounds = array<i64: 1, 32>}, {transform_indices = @transform_14, window_bounds = array<i64: 1, 8, 32>}]} {
    %c0 = arith.constant 0 : index
    %c0_0 = arith.constant 0 : index
    %c0_1 = arith.constant 0 : index
    %0 = vector.load %arg1[%c0, %c0_0, %c0_1] : memref<1x8x32xf32, #tpu.memory_space<vmem>>, vector<1x8x32xf32>
    %1 = vector.shape_cast %0 : vector<1x8x32xf32> to vector<8x32xf32>
    %c0_2 = arith.constant 0 : index
    %c0_3 = arith.constant 0 : index
    %c0_4 = arith.constant 0 : index
    %2 = vector.load %arg2[%c0_2, %c0_3, %c0_4] : memref<1x1x8xf32, #tpu.memory_space<vmem>>, vector<1x1x8xf32>
    %3 = vector.shape_cast %2 : vector<1x1x8xf32> to vector<1x8xf32>
    %4 = arith.truncf %1 : vector<8x32xf32> to vector<8x32xbf16>
    %c0_5 = arith.constant 0 : index
    %c0_6 = arith.constant 0 : index
    %5 = vector.load %arg3[%c0_5, %c0_6] : memref<32x96xbf16, #tpu.memory_space<vmem>>, vector<32x96xbf16>
    %cst = arith.constant dense<0.000000e+00> : vector<8x96xf32>
    %6 = tpu.matmul %4, %5, %cst {dimension_numbers = #tpu.dot_dimension_numbers<[1], [0], [0], [1], [0, 0, 1, 1], [], []>} : vector<8x32xbf16>, vector<32x96xbf16>, vector<8x96xf32> -> vector<8x96xf32>
    %c0_7 = arith.constant 0 : index
    %c0_8 = arith.constant 0 : index
    %7 = vector.load %arg4[%c0_7, %c0_8] : memref<1x96xf32, #tpu.memory_space<vmem>>, vector<1x96xf32>
    %8 = vector.broadcast %7 : vector<1x96xf32> to vector<8x96xf32>
    %9 = arith.addf %6, %8 : vector<8x96xf32>
    %cst_9 = arith.constant 0.000000e+00 : f32
    %10 = vector.broadcast %cst_9 : f32 to vector<8x32xf32>
    %11 = vector.extract_strided_slice %9 {offsets = [0, 0], sizes = [8, 16], strides = [1, 1]} : vector<8x96xf32> to vector<8x16xf32>
    %12 = vector.extract_strided_slice %9 {offsets = [0, 32], sizes = [8, 16], strides = [1, 1]} : vector<8x96xf32> to vector<8x16xf32>
    %13 = vector.extract_strided_slice %9 {offsets = [0, 64], sizes = [8, 16], strides = [1, 1]} : vector<8x96xf32> to vector<8x16xf32>
    %14 = arith.truncf %11 : vector<8x16xf32> to vector<8x16xbf16>
    %15 = tpu.transpose %12, [1, 0] : vector<8x16xf32> -> vector<16x8xf32>
    %16 = arith.truncf %15 : vector<16x8xf32> to vector<16x8xbf16>
    %cst_10 = arith.constant dense<0.000000e+00> : vector<8x8xf32>
    %17 = tpu.matmul %14, %16, %cst_10 {dimension_numbers = #tpu.dot_dimension_numbers<[1], [0], [0], [1], [0, 0, 1, 1], [], []>} : vector<8x16xbf16>, vector<16x8xbf16>, vector<8x8xf32> -> vector<8x8xf32>
    %cst_11 = arith.constant 2.500000e-01 : f32
    %18 = vector.broadcast %cst_11 : f32 to vector<8x8xf32>
    %19 = arith.mulf %17, %18 : vector<8x8xf32>
    %20 = vector.broadcast %3 : vector<1x8xf32> to vector<8x8xf32>
    %21 = arith.addf %19, %20 : vector<8x8xf32>
    %cst_12 = arith.constant dense<0xFF800000> : vector<8xf32>
    %22 = vector.multi_reduction <maximumf>, %21, %cst_12 [1] : vector<8x8xf32> to vector<8xf32>
    %23 = vector.shape_cast %22 : vector<8xf32> to vector<8x1xf32>
    %24 = vector.broadcast %23 : vector<8x1xf32> to vector<8x8xf32>
    %25 = arith.subf %21, %24 : vector<8x8xf32>
    %26 = math.exp %25 : vector<8x8xf32>
    %cst_13 = arith.constant dense<0.000000e+00> : vector<8xf32>
    %27 = vector.multi_reduction <add>, %26, %cst_13 [1] : vector<8x8xf32> to vector<8xf32>
    %28 = vector.shape_cast %27 : vector<8xf32> to vector<8x1xf32>
    %29 = tpu.reciprocal %28 {approx = true} : vector<8x1xf32> -> vector<8x1xf32>
    %30 = vector.broadcast %29 : vector<8x1xf32> to vector<8x8xf32>
    %31 = arith.mulf %26, %30 : vector<8x8xf32>
    %32 = arith.truncf %31 : vector<8x8xf32> to vector<8x8xbf16>
    %33 = arith.truncf %13 : vector<8x16xf32> to vector<8x16xbf16>
    %cst_14 = arith.constant dense<0.000000e+00> : vector<8x16xf32>
    %34 = tpu.matmul %32, %33, %cst_14 {dimension_numbers = #tpu.dot_dimension_numbers<[1], [0], [0], [1], [0, 0, 1, 1], [], []>} : vector<8x8xbf16>, vector<8x16xbf16>, vector<8x16xf32> -> vector<8x16xf32>
    %35 = arith.truncf %34 : vector<8x16xf32> to vector<8x16xbf16>
    %c0_15 = arith.constant 0 : index
    %c0_16 = arith.constant 0 : index
    %c0_17 = arith.constant 0 : index
    %36 = vector.load %arg5[%c0_15, %c0_16, %c0_17] : memref<2x16x32xbf16, #tpu.memory_space<vmem>>, vector<1x16x32xbf16>
    %37 = vector.shape_cast %36 : vector<1x16x32xbf16> to vector<16x32xbf16>
    %cst_18 = arith.constant dense<0.000000e+00> : vector<8x32xf32>
    %38 = tpu.matmul %35, %37, %cst_18 {dimension_numbers = #tpu.dot_dimension_numbers<[1], [0], [0], [1], [0, 0, 1, 1], [], []>} : vector<8x16xbf16>, vector<16x32xbf16>, vector<8x32xf32> -> vector<8x32xf32>
    %39 = arith.addf %10, %38 : vector<8x32xf32>
    %40 = vector.extract_strided_slice %9 {offsets = [0, 16], sizes = [8, 16], strides = [1, 1]} : vector<8x96xf32> to vector<8x16xf32>
    %41 = vector.extract_strided_slice %9 {offsets = [0, 48], sizes = [8, 16], strides = [1, 1]} : vector<8x96xf32> to vector<8x16xf32>
    %42 = vector.extract_strided_slice %9 {offsets = [0, 80], sizes = [8, 16], strides = [1, 1]} : vector<8x96xf32> to vector<8x16xf32>
    %43 = arith.truncf %40 : vector<8x16xf32> to vector<8x16xbf16>
    %44 = tpu.transpose %41, [1, 0] : vector<8x16xf32> -> vector<16x8xf32>
    %45 = arith.truncf %44 : vector<16x8xf32> to vector<16x8xbf16>
    %cst_19 = arith.constant dense<0.000000e+00> : vector<8x8xf32>
    %46 = tpu.matmul %43, %45, %cst_19 {dimension_numbers = #tpu.dot_dimension_numbers<[1], [0], [0], [1], [0, 0, 1, 1], [], []>} : vector<8x16xbf16>, vector<16x8xbf16>, vector<8x8xf32> -> vector<8x8xf32>
    %cst_20 = arith.constant 2.500000e-01 : f32
    %47 = vector.broadcast %cst_20 : f32 to vector<8x8xf32>
    %48 = arith.mulf %46, %47 : vector<8x8xf32>
    %49 = vector.broadcast %3 : vector<1x8xf32> to vector<8x8xf32>
    %50 = arith.addf %48, %49 : vector<8x8xf32>
    %cst_21 = arith.constant dense<0xFF800000> : vector<8xf32>
    %51 = vector.multi_reduction <maximumf>, %50, %cst_21 [1] : vector<8x8xf32> to vector<8xf32>
    %52 = vector.shape_cast %51 : vector<8xf32> to vector<8x1xf32>
    %53 = vector.broadcast %52 : vector<8x1xf32> to vector<8x8xf32>
    %54 = arith.subf %50, %53 : vector<8x8xf32>
    %55 = math.exp %54 : vector<8x8xf32>
    %cst_22 = arith.constant dense<0.000000e+00> : vector<8xf32>
    %56 = vector.multi_reduction <add>, %55, %cst_22 [1] : vector<8x8xf32> to vector<8xf32>
    %57 = vector.shape_cast %56 : vector<8xf32> to vector<8x1xf32>
    %58 = tpu.reciprocal %57 {approx = true} : vector<8x1xf32> -> vector<8x1xf32>
    %59 = vector.broadcast %58 : vector<8x1xf32> to vector<8x8xf32>
    %60 = arith.mulf %55, %59 : vector<8x8xf32>
    %61 = arith.truncf %60 : vector<8x8xf32> to vector<8x8xbf16>
    %62 = arith.truncf %42 : vector<8x16xf32> to vector<8x16xbf16>
    %cst_23 = arith.constant dense<0.000000e+00> : vector<8x16xf32>
    %63 = tpu.matmul %61, %62, %cst_23 {dimension_numbers = #tpu.dot_dimension_numbers<[1], [0], [0], [1], [0, 0, 1, 1], [], []>} : vector<8x8xbf16>, vector<8x16xbf16>, vector<8x16xf32> -> vector<8x16xf32>
    %64 = arith.truncf %63 : vector<8x16xf32> to vector<8x16xbf16>
    %c1 = arith.constant 1 : index
    %c0_24 = arith.constant 0 : index
    %c0_25 = arith.constant 0 : index
    %65 = vector.load %arg5[%c1, %c0_24, %c0_25] : memref<2x16x32xbf16, #tpu.memory_space<vmem>>, vector<1x16x32xbf16>
    %66 = vector.shape_cast %65 : vector<1x16x32xbf16> to vector<16x32xbf16>
    %cst_26 = arith.constant dense<0.000000e+00> : vector<8x32xf32>
    %67 = tpu.matmul %64, %66, %cst_26 {dimension_numbers = #tpu.dot_dimension_numbers<[1], [0], [0], [1], [0, 0, 1, 1], [], []>} : vector<8x16xbf16>, vector<16x32xbf16>, vector<8x32xf32> -> vector<8x32xf32>
    %68 = arith.addf %39, %67 : vector<8x32xf32>
    %c0_27 = arith.constant 0 : index
    %c0_28 = arith.constant 0 : index
    %69 = vector.load %arg6[%c0_27, %c0_28] : memref<1x32xf32, #tpu.memory_space<vmem>>, vector<1x32xf32>
    %70 = vector.broadcast %69 : vector<1x32xf32> to vector<8x32xf32>
    %71 = arith.addf %68, %70 : vector<8x32xf32>
    %72 = arith.addf %1, %71 : vector<8x32xf32>
    %c0_29 = arith.constant 0 : index
    %c0_30 = arith.constant 0 : index
    %73 = vector.load %arg7[%c0_29, %c0_30] : memref<1x32xf32, #tpu.memory_space<vmem>>, vector<1x32xf32>
    %c0_31 = arith.constant 0 : index
    %c0_32 = arith.constant 0 : index
    %74 = vector.load %arg8[%c0_31, %c0_32] : memref<1x32xf32, #tpu.memory_space<vmem>>, vector<1x32xf32>
    %cst_33 = arith.constant dense<0.000000e+00> : vector<8xf32>
    %75 = vector.multi_reduction <add>, %72, %cst_33 [1] : vector<8x32xf32> to vector<8xf32>
    %76 = vector.shape_cast %75 : vector<8xf32> to vector<8x1xf32>
    %cst_34 = arith.constant 3.200000e+01 : f32
    %77 = vector.broadcast %cst_34 : f32 to vector<8x1xf32>
    %78 = arith.divf %76, %77 : vector<8x1xf32>
    %79 = vector.broadcast %78 : vector<8x1xf32> to vector<8x32xf32>
    %80 = arith.subf %72, %79 : vector<8x32xf32>
    %81 = arith.mulf %80, %80 : vector<8x32xf32>
    %cst_35 = arith.constant dense<0.000000e+00> : vector<8xf32>
    %82 = vector.multi_reduction <add>, %81, %cst_35 [1] : vector<8x32xf32> to vector<8xf32>
    %83 = vector.shape_cast %82 : vector<8xf32> to vector<8x1xf32>
    %cst_36 = arith.constant 3.200000e+01 : f32
    %84 = vector.broadcast %cst_36 : f32 to vector<8x1xf32>
    %85 = arith.divf %83, %84 : vector<8x1xf32>
    %86 = vector.broadcast %78 : vector<8x1xf32> to vector<8x32xf32>
    %87 = arith.subf %72, %86 : vector<8x32xf32>
    %cst_37 = arith.constant 9.99999974E-6 : f32
    %88 = vector.broadcast %cst_37 : f32 to vector<8x1xf32>
    %89 = arith.addf %85, %88 : vector<8x1xf32>
    %90 = math.rsqrt %89 : vector<8x1xf32>
    %91 = vector.broadcast %90 : vector<8x1xf32> to vector<8x32xf32>
    %92 = arith.mulf %87, %91 : vector<8x32xf32>
    %93 = vector.broadcast %73 : vector<1x32xf32> to vector<8x32xf32>
    %94 = arith.mulf %92, %93 : vector<8x32xf32>
    %95 = vector.broadcast %74 : vector<1x32xf32> to vector<8x32xf32>
    %96 = arith.addf %94, %95 : vector<8x32xf32>
    %97 = arith.truncf %96 : vector<8x32xf32> to vector<8x32xbf16>
    %c0_38 = arith.constant 0 : index
    %c0_39 = arith.constant 0 : index
    %98 = vector.load %arg9[%c0_38, %c0_39] : memref<32x64xbf16, #tpu.memory_space<vmem>>, vector<32x64xbf16>
    %cst_40 = arith.constant dense<0.000000e+00> : vector<8x64xf32>
    %99 = tpu.matmul %97, %98, %cst_40 {dimension_numbers = #tpu.dot_dimension_numbers<[1], [0], [0], [1], [0, 0, 1, 1], [], []>} : vector<8x32xbf16>, vector<32x64xbf16>, vector<8x64xf32> -> vector<8x64xf32>
    %c0_41 = arith.constant 0 : index
    %c0_42 = arith.constant 0 : index
    %100 = vector.load %arg10[%c0_41, %c0_42] : memref<1x64xf32, #tpu.memory_space<vmem>>, vector<1x64xf32>
    %101 = vector.broadcast %100 : vector<1x64xf32> to vector<8x64xf32>
    %102 = arith.addf %99, %101 : vector<8x64xf32>
    %cst_43 = arith.constant 0.000000e+00 : f32
    %103 = vector.broadcast %cst_43 : f32 to vector<8x64xf32>
    %104 = arith.maximumf %102, %103 : vector<8x64xf32>
    %105 = arith.truncf %104 : vector<8x64xf32> to vector<8x64xbf16>
    %c0_44 = arith.constant 0 : index
    %c0_45 = arith.constant 0 : index
    %106 = vector.load %arg11[%c0_44, %c0_45] : memref<64x32xbf16, #tpu.memory_space<vmem>>, vector<64x32xbf16>
    %cst_46 = arith.constant dense<0.000000e+00> : vector<8x32xf32>
    %107 = tpu.matmul %105, %106, %cst_46 {dimension_numbers = #tpu.dot_dimension_numbers<[1], [0], [0], [1], [0, 0, 1, 1], [], []>} : vector<8x64xbf16>, vector<64x32xbf16>, vector<8x32xf32> -> vector<8x32xf32>
    %c0_47 = arith.constant 0 : index
    %c0_48 = arith.constant 0 : index
    %108 = vector.load %arg12[%c0_47, %c0_48] : memref<1x32xf32, #tpu.memory_space<vmem>>, vector<1x32xf32>
    %109 = vector.broadcast %108 : vector<1x32xf32> to vector<8x32xf32>
    %110 = arith.addf %107, %109 : vector<8x32xf32>
    %111 = arith.addf %96, %110 : vector<8x32xf32>
    %c0_49 = arith.constant 0 : index
    %c0_50 = arith.constant 0 : index
    %112 = vector.load %arg13[%c0_49, %c0_50] : memref<1x32xf32, #tpu.memory_space<vmem>>, vector<1x32xf32>
    %c0_51 = arith.constant 0 : index
    %c0_52 = arith.constant 0 : index
    %113 = vector.load %arg14[%c0_51, %c0_52] : memref<1x32xf32, #tpu.memory_space<vmem>>, vector<1x32xf32>
    %cst_53 = arith.constant dense<0.000000e+00> : vector<8xf32>
    %114 = vector.multi_reduction <add>, %111, %cst_53 [1] : vector<8x32xf32> to vector<8xf32>
    %115 = vector.shape_cast %114 : vector<8xf32> to vector<8x1xf32>
    %cst_54 = arith.constant 3.200000e+01 : f32
    %116 = vector.broadcast %cst_54 : f32 to vector<8x1xf32>
    %117 = arith.divf %115, %116 : vector<8x1xf32>
    %118 = vector.broadcast %117 : vector<8x1xf32> to vector<8x32xf32>
    %119 = arith.subf %111, %118 : vector<8x32xf32>
    %120 = arith.mulf %119, %119 : vector<8x32xf32>
    %cst_55 = arith.constant dense<0.000000e+00> : vector<8xf32>
    %121 = vector.multi_reduction <add>, %120, %cst_55 [1] : vector<8x32xf32> to vector<8xf32>
    %122 = vector.shape_cast %121 : vector<8xf32> to vector<8x1xf32>
    %cst_56 = arith.constant 3.200000e+01 : f32
    %123 = vector.broadcast %cst_56 : f32 to vector<8x1xf32>
    %124 = arith.divf %122, %123 : vector<8x1xf32>
    %125 = vector.broadcast %117 : vector<8x1xf32> to vector<8x32xf32>
    %126 = arith.subf %111, %125 : vector<8x32xf32>
    %cst_57 = arith.constant 9.99999974E-6 : f32
    %127 = vector.broadcast %cst_57 : f32 to vector<8x1xf32>
    %128 = arith.addf %124, %127 : vector<8x1xf32>
    %129 = math.rsqrt %128 : vector<8x1xf32>
    %130 = vector.broadcast %129 : vector<8x1xf32> to vector<8x32xf32>
    %131 = arith.mulf %126, %130 : vector<8x32xf32>
    %132 = vector.broadcast %112 : vector<1x32xf32> to vector<8x32xf32>
    %133 = arith.mulf %131, %132 : vector<8x32xf32>
    %134 = vector.broadcast %113 : vector<1x32xf32> to vector<8x32xf32>
    %135 = arith.addf %133, %134 : vector<8x32xf32>
    %c0_58 = arith.constant 0 : index
    %c0_59 = arith.constant 0 : index
    %c0_60 = arith.constant 0 : index
    %136 = vector.load %arg15[%c0_58, %c0_59, %c0_60] : memref<1x8x32xf32, #tpu.memory_space<vmem>>, vector<1x8x32xf32>
    %137 = vector.shape_cast %136 : vector<1x8x32xf32> to vector<8x32xf32>
    %138 = vector.shape_cast %135 : vector<8x32xf32> to vector<1x8x32xf32>
    tpu.vector_store %arg15[%c0_58, %c0_59, %c0_60], %138 {strides = array<i32>} : memref<1x8x32xf32, #tpu.memory_space<vmem>>, vector<1x8x32xf32>,
    return
  }
  func.func @transform_0(%arg0: i32) -> (i32, i32, i32) {
    %c0_i32 = arith.constant 0 : i32
    %c0_i32_0 = arith.constant 0 : i32
    %c0_i32_1 = arith.constant 0 : i32
    return %arg0, %c0_i32, %c0_i32_0 : i32, i32, i32
  }
  func.func @transform_1(%arg0: i32) -> (i32, i32, i32) {
    %c0_i32 = arith.constant 0 : i32
    %c0_i32_0 = arith.constant 0 : i32
    %c0_i32_1 = arith.constant 0 : i32
    return %arg0, %c0_i32, %c0_i32_0 : i32, i32, i32
  }
  func.func @transform_2(%arg0: i32) -> (i32, i32) {
    %c0_i32 = arith.constant 0 : i32
    %c0_i32_0 = arith.constant 0 : i32
    %c0_i32_1 = arith.constant 0 : i32
    return %c0_i32, %c0_i32_0 : i32, i32
  }
  func.func @transform_3(%arg0: i32) -> (i32, i32) {
    %c0_i32 = arith.constant 0 : i32
    %c0_i32_0 = arith.constant 0 : i32
    %c0_i32_1 = arith.constant 0 : i32
    return %c0_i32, %c0_i32_0 : i32, i32
  }
  func.func @transform_4(%arg0: i32) -> (i32, i32, i32) {
    %c0_i32 = arith.constant 0 : i32
    %c0_i32_0 = arith.constant 0 : i32
    %c0_i32_1 = arith.constant 0 : i32
    %c0_i32_2 = arith.constant 0 : i32
    return %c0_i32, %c0_i32_0, %c0_i32_1 : i32, i32, i32
  }
  func.func @transform_5(%arg0: i32) -> (i32, i32) {
    %c0_i32 = arith.constant 0 : i32
    %c0_i32_0 = arith.constant 0 : i32
    %c0_i32_1 = arith.constant 0 : i32
    return %c0_i32, %c0_i32_0 : i32, i32
  }
  func.func @transform_6(%arg0: i32) -> (i32, i32) {
    %c0_i32 = arith.constant 0 : i32
    %c0_i32_0 = arith.constant 0 : i32
    %c0_i32_1 = arith.constant 0 : i32
    return %c0_i32, %c0_i32_0 : i32, i32
  }
  func.func @transform_7(%arg0: i32) -> (i32, i32) {
    %c0_i32 = arith.constant 0 : i32
    %c0_i32_0 = arith.constant 0 : i32
    %c0_i32_1 = arith.constant 0 : i32
    return %c0_i32, %c0_i32_0 : i32, i32
  }
  func.func @transform_8(%arg0: i32) -> (i32, i32) {
    %c0_i32 = arith.constant 0 : i32
    %c0_i32_0 = arith.constant 0 : i32
    %c0_i32_1 = arith.constant 0 : i32
    return %c0_i32, %c0_i32_0 : i32, i32
  }
  func.func @transform_9(%arg0: i32) -> (i32, i32) {
    %c0_i32 = arith.constant 0 : i32
    %c0_i32_0 = arith.constant 0 : i32
    %c0_i32_1 = arith.constant 0 : i32
    return %c0_i32, %c0_i32_0 : i32, i32
  }
  func.func @transform_10(%arg0: i32) -> (i32, i32) {
    %c0_i32 = arith.constant 0 : i32
    %c0_i32_0 = arith.constant 0 : i32
    %c0_i32_1 = arith.constant 0 : i32
    return %c0_i32, %c0_i32_0 : i32, i32
  }
  func.func @transform_11(%arg0: i32) -> (i32, i32) {
    %c0_i32 = arith.constant 0 : i32
    %c0_i32_0 = arith.constant 0 : i32
    %c0_i32_1 = arith.constant 0 : i32
    return %c0_i32, %c0_i32_0 : i32, i32
  }
  func.func @transform_12(%arg0: i32) -> (i32, i32) {
    %c0_i32 = arith.constant 0 : i32
    %c0_i32_0 = arith.constant 0 : i32
    %c0_i32_1 = arith.constant 0 : i32
    return %c0_i32, %c0_i32_0 : i32, i32
  }
  func.func @transform_13(%arg0: i32) -> (i32, i32) {
    %c0_i32 = arith.constant 0 : i32
    %c0_i32_0 = arith.constant 0 : i32
    %c0_i32_1 = arith.constant 0 : i32
    return %c0_i32, %c0_i32_0 : i32, i32
  }
  func.func @transform_14(%arg0: i32) -> (i32, i32, i32) {
    %c0_i32 = arith.constant 0 : i32
    %c0_i32_0 = arith.constant 0 : i32
    %c0_i32_1 = arith.constant 0 : i32
    return %arg0, %c0_i32, %c0_i32_0 : i32, i32, i32
  }
}

</mosaic_0001>

<llo_original>
// kernel: tpu_custom_call.1
$region0: #{tpu_custom_call.1}
  #allocation0 [shape = 'u32[]', space=smem, size = 0x4, offset = 0x4, fixed_abs, tag = 'smem constant byte address 0x4 - core index']
  #allocation1 [shape = 'u32[144,128]{1,0:T(1,128)}', space=vmem, size = 0x12000, scoped, tag = 'internal scratch']
  %s0 = inlined_call_operand.vmem [shape: f32[2,8,32], index: 0, kind: input, shape index: {}]
  %s1 = inlined_call_operand.vmem [shape: f32[2,1,8], index: 1, kind: input, shape index: {}]
  %s2 = inlined_call_operand.vmem [shape: bf16[32,96], index: 2, kind: input, shape index: {}]
  %s3 = inlined_call_operand.vmem [shape: f32[1,96], index: 3, kind: input, shape index: {}]
  %s4 = inlined_call_operand.vmem [shape: bf16[2,16,32], index: 4, kind: input, shape index: {}]
  %s5 = inlined_call_operand.vmem [shape: f32[1,32], index: 5, kind: input, shape index: {}]
  %s6 = inlined_call_operand.vmem [shape: f32[1,32], index: 6, kind: input, shape index: {}]
  %s7 = inlined_call_operand.vmem [shape: f32[1,32], index: 7, kind: input, shape index: {}]
  %s8 = inlined_call_operand.hbm [shape: bf16[32,64], index: 8, kind: input, shape index: {}]
  %s9 = inlined_call_operand.vmem [shape: f32[1,64], index: 9, kind: input, shape index: {}]
  %s10 = inlined_call_operand.vmem [shape: bf16[64,32], index: 10, kind: input, shape index: {}]
  %s11 = inlined_call_operand.vmem [shape: f32[1,32], index: 11, kind: input, shape index: {}]
  %s12 = inlined_call_operand.vmem [shape: f32[1,32], index: 12, kind: input, shape index: {}]
  %s13 = inlined_call_operand.vmem [shape: f32[1,32], index: 13, kind: input, shape index: {}]
  %s14 = inlined_call_operand.hbm [shape: f32[2,8,32], index: 14, kind: output, shape index: {}]
  %s15 = sld [smem:[#allocation0]]
  $region93: #{tpu_custom_call.1} parent=0
    _
  %s17 = ssub.s32 1, %s15
  %s18 = scalar_select 0, %s17, %s15
  $region1: #{tpu_custom_call.1} parent=0
    #allocation2 [shape = 'u8[8192]{0}', space=vmem, size = 0x2000, scoped, tag = 'input window, operand 8, single buffered']
    #allocation3 [shape = 's32[2]{0}', space=sflag, size = 0x8, scoped, tag = 'scoped memory for tpu_custom_call.1']
    #allocation4 [shape = 's32[2]{0}', space=sflag, size = 0x8, scoped, tag = 'scoped memory for tpu_custom_call.1']
    #allocation5 [shape = 'u8[8192]{0}', space=vmem, size = 0x2000, scoped, tag = 'output window, operand 0']
    %19 = vsyncpa [#allocation3], 0
    %20 = vsyncpa [#allocation4], 0
    %s21 = scalar_lea.sflag [#allocation4], 1
    %22 = vsyncpa %s21, 0
    loop: start=0, step=1, limit=4
    $region2: #{tpu_custom_call.1} parent=1 // loop_pre_header
      _
    $region3: #{tpu_custom_call.1} parent=1 // loop_header
      %s24 = sphi 0, %s28
      %p25 = scmp.ge.s32.totalorder %s24, 4
      %s34 = sphi 0, %s36
      %s37 = sphi 0, %s34
      %s38 = sphi 0, %s37
      %s54 = sphi 0, %s38
      %s60 = sphi 0, %s62
      %s63 = sphi 0, %s60
      %s64 = sphi 0, %s63
      %s80 = sphi 0, %s64
      %s84 = sphi 0, %s84
      %s86 = sphi 0, %s84
      %s87 = sphi 0, %s86
      %s101 = sphi 0, %s87
      %s105 = sphi 0, %s105
      %s107 = sphi 0, %s105
      %s108 = sphi 0, %s107
      %s122 = sphi 0, %s108
      %s126 = sphi 0, %s126
      %s128 = sphi 0, %s126
      %s129 = sphi 0, %s128
      %s143 = sphi 0, %s129
      %s147 = sphi 0, %s147
      %s149 = sphi 0, %s147
      %s150 = sphi 0, %s149
      %s164 = sphi 0, %s150
      %s168 = sphi 0, %s168
      %s170 = sphi 0, %s168
      %s171 = sphi 0, %s170
      %s185 = sphi 0, %s171
      %s189 = sphi 0, %s189
      %s191 = sphi 0, %s189
      %s192 = sphi 0, %s191
      %s206 = sphi 0, %s192
      %s210 = sphi 0, %s210
      %s212 = sphi 0, %s210
      %s213 = sphi 0, %s212
      %s227 = sphi 0, %s213
      %s231 = sphi 0, %s231
      %s233 = sphi 0, %s231
      %s234 = sphi 0, %s233
      %s248 = sphi 0, %s234
      %s252 = sphi 0, %s252
      %s254 = sphi 0, %s252
      %s255 = sphi 0, %s254
      %s269 = sphi 0, %s255
      %s273 = sphi 0, %s273
      %s275 = sphi 0, %s273
      %s276 = sphi 0, %s275
      %s290 = sphi 0, %s276
      %s294 = sphi 0, %s294
      %s296 = sphi 0, %s294
      %s297 = sphi 0, %s296
      %s311 = sphi 0, %s297
      %s315 = sphi 0, %s315
      %s317 = sphi 0, %s315
      %s318 = sphi 0, %s317
      %s332 = sphi 0, %s318
      %s338 = sphi 0, %s340
      %s341 = sphi 0, %s338
      %s342 = sphi 0, %s341
      %s358 = sphi 0, %s342
    $region4: #{tpu_custom_call.1} parent=1 // loop_header_branch
      %27 = sbr.rel (%p25) target = $region8
    $region5: #{tpu_custom_call.1} parent=1 // loop_body
      %s29 = ssub.s32 %s24, 1
      %s30 = ssub.s32 %s24, 2
      %s31 = sadd.s32 %s24, 1
      %s32 = ssub.s32 %s24, %s31
      %p33 = scmp.eq.s32.totalorder %s32, 0
      %s35 = sadd.s32 %s34, 1
      %s36 = scalar_select %p33, %s34, %s35
      %p39 = pneg %p33
      %p40 = scmp.eq.s32.totalorder %s24, 1
      %p41 = por %p39, %p40
      %p42 = scmp.ne.s32.totalorder %s34, %s37
      %p43 = scmp.eq.s32.totalorder %s24, 0
      %p44 = por %p42, %p43
      %p45 = scmp.ne.s32.totalorder %s34, %s37
      %p46 = scmp.eq.s32.totalorder %s29, 1
      %p47 = por %p45, %p46
      %p48 = scmp.ne.s32.totalorder %s37, %s38
      %p49 = scmp.eq.s32.totalorder %s29, 0
      %p50 = por %p48, %p49
      %p51 = scmp.ne.s32.totalorder %s37, %s38
      %p52 = scmp.eq.s32.totalorder %s30, 1
      %p53 = por %p51, %p52
      %p55 = scmp.ne.s32.totalorder %s38, %s54
      %p56 = scmp.eq.s32.totalorder %s30, 0
      %p57 = por %p55, %p56
      %s58 = ssub.s32 %s24, %s31
      %p59 = scmp.eq.s32.totalorder %s58, 0
      %s61 = sadd.s32 %s60, 1
      %s62 = scalar_select %p59, %s60, %s61
      %p65 = pneg %p59
      %p66 = scmp.eq.s32.totalorder %s24, 1
      %p67 = por %p65, %p66
      %p68 = scmp.ne.s32.totalorder %s60, %s63
      %p69 = scmp.eq.s32.totalorder %s24, 0
      %p70 = por %p68, %p69
      %p71 = scmp.ne.s32.totalorder %s60, %s63
      %p72 = scmp.eq.s32.totalorder %s29, 1
      %p73 = por %p71, %p72
      %p74 = scmp.ne.s32.totalorder %s63, %s64
      %p75 = scmp.eq.s32.totalorder %s29, 0
      %p76 = por %p74, %p75
      %p77 = scmp.ne.s32.totalorder %s63, %s64
      %p78 = scmp.eq.s32.totalorder %s30, 1
      %p79 = por %p77, %p78
      %p81 = scmp.ne.s32.totalorder %s64, %s80
      %p82 = scmp.eq.s32.totalorder %s30, 0
      %p83 = por %p81, %p82
      %s85 = sadd.s32 %s84, 1
      %p88 = scmp.eq.s32.totalorder %s24, 1
      %p89 = scmp.ne.s32.totalorder %s84, %s86
      %p90 = scmp.eq.s32.totalorder %s24, 0
      %p91 = por %p89, %p90
      %p92 = scmp.ne.s32.totalorder %s84, %s86
      %p93 = scmp.eq.s32.totalorder %s29, 1
      %p94 = por %p92, %p93
      %p95 = scmp.ne.s32.totalorder %s86, %s87
      %p96 = scmp.eq.s32.totalorder %s29, 0
      %p97 = por %p95, %p96
      %p98 = scmp.ne.s32.totalorder %s86, %s87
      %p99 = scmp.eq.s32.totalorder %s30, 1
      %p100 = por %p98, %p99
      %p102 = scmp.ne.s32.totalorder %s87, %s101
      %p103 = scmp.eq.s32.totalorder %s30, 0
      %p104 = por %p102, %p103
      %s106 = sadd.s32 %s105, 1
      %p109 = scmp.eq.s32.totalorder %s24, 1
      %p110 = scmp.ne.s32.totalorder %s105, %s107
      %p111 = scmp.eq.s32.totalorder %s24, 0
      %p112 = por %p110, %p111
      %p113 = scmp.ne.s32.totalorder %s105, %s107
      %p114 = scmp.eq.s32.totalorder %s29, 1
      %p115 = por %p113, %p114
      %p116 = scmp.ne.s32.totalorder %s107, %s108
      %p117 = scmp.eq.s32.totalorder %s29, 0
      %p118 = por %p116, %p117
      %p119 = scmp.ne.s32.totalorder %s107, %s108
      %p120 = scmp.eq.s32.totalorder %s30, 1
      %p121 = por %p119, %p120
      %p123 = scmp.ne.s32.totalorder %s108, %s122
      %p124 = scmp.eq.s32.totalorder %s30, 0
      %p125 = por %p123, %p124
      %s127 = sadd.s32 %s126, 1
      %p130 = scmp.eq.s32.totalorder %s24, 1
      %p131 = scmp.ne.s32.totalorder %s126, %s128
      %p132 = scmp.eq.s32.totalorder %s24, 0
      %p133 = por %p131, %p132
      %p134 = scmp.ne.s32.totalorder %s126, %s128
      %p135 = scmp.eq.s32.totalorder %s29, 1
      %p136 = por %p134, %p135
      %p137 = scmp.ne.s32.totalorder %s128, %s129
      %p138 = scmp.eq.s32.totalorder %s29, 0
      %p139 = por %p137, %p138
      %p140 = scmp.ne.s32.totalorder %s128, %s129
      %p141 = scmp.eq.s32.totalorder %s30, 1
      %p142 = por %p140, %p141
      %p144 = scmp.ne.s32.totalorder %s129, %s143
      %p145 = scmp.eq.s32.totalorder %s30, 0
      %p146 = por %p144, %p145
      %s148 = sadd.s32 %s147, 1
      %p151 = scmp.eq.s32.totalorder %s24, 1
      %p152 = scmp.ne.s32.totalorder %s147, %s149
      %p153 = scmp.eq.s32.totalorder %s24, 0
      %p154 = por %p152, %p153
      %p155 = scmp.ne.s32.totalorder %s147, %s149
      %p156 = scmp.eq.s32.totalorder %s29, 1
      %p157 = por %p155, %p156
      %p158 = scmp.ne.s32.totalorder %s149, %s150
      %p159 = scmp.eq.s32.totalorder %s29, 0
      %p160 = por %p158, %p159
      %p161 = scmp.ne.s32.totalorder %s149, %s150
      %p162 = scmp.eq.s32.totalorder %s30, 1
      %p163 = por %p161, %p162
      %p165 = scmp.ne.s32.totalorder %s150, %s164
      %p166 = scmp.eq.s32.totalorder %s30, 0
      %p167 = por %p165, %p166
      %s169 = sadd.s32 %s168, 1
      %p172 = scmp.eq.s32.totalorder %s24, 1
      %p173 = scmp.ne.s32.totalorder %s168, %s170
      %p174 = scmp.eq.s32.totalorder %s24, 0
      %p175 = por %p173, %p174
      %p176 = scmp.ne.s32.totalorder %s168, %s170
      %p177 = scmp.eq.s32.totalorder %s29, 1
      %p178 = por %p176, %p177
      %p179 = scmp.ne.s32.totalorder %s170, %s171
      %p180 = scmp.eq.s32.totalorder %s29, 0
      %p181 = por %p179, %p180
      %p182 = scmp.ne.s32.totalorder %s170, %s171
      %p183 = scmp.eq.s32.totalorder %s30, 1
      %p184 = por %p182, %p183
      %p186 = scmp.ne.s32.totalorder %s171, %s185
      %p187 = scmp.eq.s32.totalorder %s30, 0
      %p188 = por %p186, %p187
      %s190 = sadd.s32 %s189, 1
      %p193 = scmp.eq.s32.totalorder %s24, 1
      %p194 = scmp.ne.s32.totalorder %s189, %s191
      %p195 = scmp.eq.s32.totalorder %s24, 0
      %p196 = por %p194, %p195
      %p197 = scmp.ne.s32.totalorder %s189, %s191
      %p198 = scmp.eq.s32.totalorder %s29, 1
      %p199 = por %p197, %p198
      %p200 = scmp.ne.s32.totalorder %s191, %s192
      %p201 = scmp.eq.s32.totalorder %s29, 0
      %p202 = por %p200, %p201
      %p203 = scmp.ne.s32.totalorder %s191, %s192
      %p204 = scmp.eq.s32.totalorder %s30, 1
      %p205 = por %p203, %p204
      %p207 = scmp.ne.s32.totalorder %s192, %s206
      %p208 = scmp.eq.s32.totalorder %s30, 0
      %p209 = por %p207, %p208
      %s211 = sadd.s32 %s210, 1
      %p214 = scmp.eq.s32.totalorder %s24, 1
      %p215 = scmp.ne.s32.totalorder %s210, %s212
      %p216 = scmp.eq.s32.totalorder %s24, 0
      %p217 = por %p215, %p216
      %p218 = scmp.ne.s32.totalorder %s210, %s212
      %p219 = scmp.eq.s32.totalorder %s29, 1
      %p220 = por %p218, %p219
      %p221 = scmp.ne.s32.totalorder %s212, %s213
      %p222 = scmp.eq.s32.totalorder %s29, 0
      %p223 = por %p221, %p222
      %p224 = scmp.ne.s32.totalorder %s212, %s213
      %p225 = scmp.eq.s32.totalorder %s30, 1
      %p226 = por %p224, %p225
      %p228 = scmp.ne.s32.totalorder %s213, %s227
      %p229 = scmp.eq.s32.totalorder %s30, 0
      %p230 = por %p228, %p229
      %s232 = sadd.s32 %s231, 1
      %p235 = scmp.eq.s32.totalorder %s24, 1
      %p236 = scmp.ne.s32.totalorder %s231, %s233
      %p237 = scmp.eq.s32.totalorder %s24, 0
      %p238 = por %p236, %p237
      %p239 = scmp.ne.s32.totalorder %s231, %s233
      %p240 = scmp.eq.s32.totalorder %s29, 1
      %p241 = por %p239, %p240
      %p242 = scmp.ne.s32.totalorder %s233, %s234
      %p243 = scmp.eq.s32.totalorder %s29, 0
      %p244 = por %p242, %p243
      %p245 = scmp.ne.s32.totalorder %s233, %s234
      %p246 = scmp.eq.s32.totalorder %s30, 1
      %p247 = por %p245, %p246
      %p249 = scmp.ne.s32.totalorder %s234, %s248
      %p250 = scmp.eq.s32.totalorder %s30, 0
      %p251 = por %p249, %p250
      %s253 = sadd.s32 %s252, 1
      %p256 = scmp.eq.s32.totalorder %s24, 1
      %p257 = scmp.ne.s32.totalorder %s252, %s254
      %p258 = scmp.eq.s32.totalorder %s24, 0
      %p259 = por %p257, %p258
      %p260 = scmp.ne.s32.totalorder %s252, %s254
      %p261 = scmp.eq.s32.totalorder %s29, 1
      %p262 = por %p260, %p261
      %p263 = scmp.ne.s32.totalorder %s254, %s255
      %p264 = scmp.eq.s32.totalorder %s29, 0
      %p265 = por %p263, %p264
      %p266 = scmp.ne.s32.totalorder %s254, %s255
      %p267 = scmp.eq.s32.totalorder %s30, 1
      %p268 = por %p266, %p267
      %p270 = scmp.ne.s32.totalorder %s255, %s269
      %p271 = scmp.eq.s32.totalorder %s30, 0
      %p272 = por %p270, %p271
      %s274 = sadd.s32 %s273, 1
      %p277 = scmp.eq.s32.totalorder %s24, 1
      %p278 = scmp.ne.s32.totalorder %s273, %s275
      %p279 = scmp.eq.s32.totalorder %s24, 0
      %p280 = por %p278, %p279
      %p281 = scmp.ne.s32.totalorder %s273, %s275
      %p282 = scmp.eq.s32.totalorder %s29, 1
      %p283 = por %p281, %p282
      %p284 = scmp.ne.s32.totalorder %s275, %s276
      %p285 = scmp.eq.s32.totalorder %s29, 0
      %p286 = por %p284, %p285
      %p287 = scmp.ne.s32.totalorder %s275, %s276
      %p288 = scmp.eq.s32.totalorder %s30, 1
      %p289 = por %p287, %p288
      %p291 = scmp.ne.s32.totalorder %s276, %s290
      %p292 = scmp.eq.s32.totalorder %s30, 0
      %p293 = por %p291, %p292
      %s295 = sadd.s32 %s294, 1
      %p298 = scmp.eq.s32.totalorder %s24, 1
      %p299 = scmp.ne.s32.totalorder %s294, %s296
      %p300 = scmp.eq.s32.totalorder %s24, 0
      %p301 = por %p299, %p300
      %p302 = scmp.ne.s32.totalorder %s294, %s296
      %p303 = scmp.eq.s32.totalorder %s29, 1
      %p304 = por %p302, %p303
      %p305 = scmp.ne.s32.totalorder %s296, %s297
      %p306 = scmp.eq.s32.totalorder %s29, 0
      %p307 = por %p305, %p306
      %p308 = scmp.ne.s32.totalorder %s296, %s297
      %p309 = scmp.eq.s32.totalorder %s30, 1
      %p310 = por %p308, %p309
      %p312 = scmp.ne.s32.totalorder %s297, %s311
      %p313 = scmp.eq.s32.totalorder %s30, 0
      %p314 = por %p312, %p313
      %s316 = sadd.s32 %s315, 1
      %p319 = scmp.eq.s32.totalorder %s24, 1
      %p320 = scmp.ne.s32.totalorder %s315, %s317
      %p321 = scmp.eq.s32.totalorder %s24, 0
      %p322 = por %p320, %p321
      %p323 = scmp.ne.s32.totalorder %s315, %s317
      %p324 = scmp.eq.s32.totalorder %s29, 1
      %p325 = por %p323, %p324
      %p326 = scmp.ne.s32.totalorder %s317, %s318
      %p327 = scmp.eq.s32.totalorder %s29, 0
      %p328 = por %p326, %p327
      %p329 = scmp.ne.s32.totalorder %s317, %s318
      %p330 = scmp.eq.s32.totalorder %s30, 1
      %p331 = por %p329, %p330
      %p333 = scmp.ne.s32.totalorder %s318, %s332
      %p334 = scmp.eq.s32.totalorder %s30, 0
      %p335 = por %p333, %p334
      %s336 = ssub.s32 %s24, %s31
      %p337 = scmp.eq.s32.totalorder %s336, 0
      %s339 = sadd.s32 %s338, 1
      %s340 = scalar_select %p337, %s338, %s339
      %p343 = pneg %p337
      %p344 = scmp.eq.s32.totalorder %s24, 1
      %p345 = por %p343, %p344
      %p346 = scmp.ne.s32.totalorder %s338, %s341
      %p347 = scmp.eq.s32.totalorder %s24, 0
      %p348 = por %p346, %p347
      %p349 = scmp.ne.s32.totalorder %s338, %s341
      %p350 = scmp.eq.s32.totalorder %s29, 1
      %p351 = por %p349, %p350
      %p352 = scmp.ne.s32.totalorder %s341, %s342
      %p353 = scmp.eq.s32.totalorder %s29, 0
      %p354 = por %p352, %p353
      %p355 = scmp.ne.s32.totalorder %s341, %s342
      %p356 = scmp.eq.s32.totalorder %s30, 1
      %p357 = por %p355, %p356
      %p359 = scmp.ne.s32.totalorder %s342, %s358
      %p360 = scmp.eq.s32.totalorder %s30, 0
      %p361 = por %p359, %p360
      %p362 = scmp.le.s32.totalorder 1, %s24
      %p363 = scmp.lt.s32.totalorder %s24, 3
      %p364 = pnand %p362, %p363
      %p365 = pneg %p364
      // Predicated region
      $region9: #{tpu_custom_call.1} parent=5 // pred_check
        _
      $region10: #{tpu_custom_call.1} parent=5 // pred_check_branch
        %367 = sbr.rel (%p364) target = $region12
      $region11: #{tpu_custom_call.1} parent=5 // pred_region
        %s368 = ssub.s32 %s24, 1
        // Predicated region
        $region13: #{tpu_custom_call.1} parent=11 // pred_check
          %p369 = pneg %p97
        $region14: #{tpu_custom_call.1} parent=11 // pred_check_branch
          %371 = sbr.rel (%p369) target = $region16
        $region15: #{tpu_custom_call.1} parent=11 // pred_region
          _
        $region16: #{tpu_custom_call.1} parent=11 // pred_fallthru
          _
        // Predicated region
        $region17: #{tpu_custom_call.1} parent=11 // pred_check
          %p372 = pneg %p118
        $region18: #{tpu_custom_call.1} parent=11 // pred_check_branch
          %374 = sbr.rel (%p372) target = $region20
        $region19: #{tpu_custom_call.1} parent=11 // pred_region
          _
        $region20: #{tpu_custom_call.1} parent=11 // pred_fallthru
          _
        // Predicated region
        $region21: #{tpu_custom_call.1} parent=11 // pred_check
          %p375 = pneg %p139
        $region22: #{tpu_custom_call.1} parent=11 // pred_check_branch
          %377 = sbr.rel (%p375) target = $region24
        $region23: #{tpu_custom_call.1} parent=11 // pred_region
          _
        $region24: #{tpu_custom_call.1} parent=11 // pred_fallthru
          _
        // Predicated region
        $region25: #{tpu_custom_call.1} parent=11 // pred_check
          %p378 = pneg %p160
        $region26: #{tpu_custom_call.1} parent=11 // pred_check_branch
          %380 = sbr.rel (%p378) target = $region28
        $region27: #{tpu_custom_call.1} parent=11 // pred_region
          _
        $region28: #{tpu_custom_call.1} parent=11 // pred_fallthru
          _
        // Predicated region
        $region29: #{tpu_custom_call.1} parent=11 // pred_check
          %p381 = pneg %p181
        $region30: #{tpu_custom_call.1} parent=11 // pred_check_branch
          %383 = sbr.rel (%p381) target = $region32
        $region31: #{tpu_custom_call.1} parent=11 // pred_region
          _
        $region32: #{tpu_custom_call.1} parent=11 // pred_fallthru
          _
        // Predicated region
        $region33: #{tpu_custom_call.1} parent=11 // pred_check
          %p384 = pneg %p202
        $region34: #{tpu_custom_call.1} parent=11 // pred_check_branch
          %386 = sbr.rel (%p384) target = $region36
        $region35: #{tpu_custom_call.1} parent=11 // pred_region
          _
        $region36: #{tpu_custom_call.1} parent=11 // pred_fallthru
          _
        // Predicated region
        $region37: #{tpu_custom_call.1} parent=11 // pred_check
          %p387 = pneg %p223
        $region38: #{tpu_custom_call.1} parent=11 // pred_check_branch
          %389 = sbr.rel (%p387) target = $region40
        $region39: #{tpu_custom_call.1} parent=11 // pred_region
          %s391 = ssub.s32 256, 256
          %392 = vsyncadd [#allocation3], %s391
          %s393 = sshll.u32 [#allocation2], 4
          %s394 = int_to_ptr.vmem [resolvable:$true] %s393
          %399 = dma.hbm_to_vmem [thread:$0]  %s8, 256, %s394, [#allocation3], 64, 64, 4
        $region40: #{tpu_custom_call.1} parent=11 // pred_fallthru
          _
        // Predicated region
        $region41: #{tpu_custom_call.1} parent=11 // pred_check
          %p400 = pneg %p244
        $region42: #{tpu_custom_call.1} parent=11 // pred_check_branch
          %402 = sbr.rel (%p400) target = $region44
        $region43: #{tpu_custom_call.1} parent=11 // pred_region
          _
        $region44: #{tpu_custom_call.1} parent=11 // pred_fallthru
          _
        // Predicated region
        $region45: #{tpu_custom_call.1} parent=11 // pred_check
          %p403 = pneg %p265
        $region46: #{tpu_custom_call.1} parent=11 // pred_check_branch
          %405 = sbr.rel (%p403) target = $region48
        $region47: #{tpu_custom_call.1} parent=11 // pred_region
          _
        $region48: #{tpu_custom_call.1} parent=11 // pred_fallthru
          _
        // Predicated region
        $region49: #{tpu_custom_call.1} parent=11 // pred_check
          %p406 = pneg %p286
        $region50: #{tpu_custom_call.1} parent=11 // pred_check_branch
          %408 = sbr.rel (%p406) target = $region52
        $region51: #{tpu_custom_call.1} parent=11 // pred_region
          _
        $region52: #{tpu_custom_call.1} parent=11 // pred_fallthru
          _
        // Predicated region
        $region53: #{tpu_custom_call.1} parent=11 // pred_check
          %p409 = pneg %p307
        $region54: #{tpu_custom_call.1} parent=11 // pred_check_branch
          %411 = sbr.rel (%p409) target = $region56
        $region55: #{tpu_custom_call.1} parent=11 // pred_region
          _
        $region56: #{tpu_custom_call.1} parent=11 // pred_fallthru
          _
        // Predicated region
        $region57: #{tpu_custom_call.1} parent=11 // pred_check
          %p412 = pneg %p328
        $region58: #{tpu_custom_call.1} parent=11 // pred_check_branch
          %414 = sbr.rel (%p412) target = $region60
        $region59: #{tpu_custom_call.1} parent=11 // pred_region
          _
        $region60: #{tpu_custom_call.1} parent=11 // pred_fallthru
          _
      $region12: #{tpu_custom_call.1} parent=5 // pred_fallthru
        _
      %p415 = scmp.lt.s32.totalorder %s24, 2
      // Predicated region
      $region61: #{tpu_custom_call.1} parent=5 // pred_check
        %p416 = pneg %p415
      $region62: #{tpu_custom_call.1} parent=5 // pred_check_branch
        %418 = sbr.rel (%p416) target = $region64
      $region63: #{tpu_custom_call.1} parent=5 // pred_region
        // Predicated region
        $region65: #{tpu_custom_call.1} parent=63 // pred_check
          %p419 = pneg %p44
        $region66: #{tpu_custom_call.1} parent=63 // pred_check_branch
          %421 = sbr.rel (%p419) target = $region68
        $region67: #{tpu_custom_call.1} parent=63 // pred_region
          %p422 = scmp.lt.s32.totalorder %s24, 1
          %s423 = scalar_select %p422, %s24, 1
          %s424 = smul.addr %s423, 8
          %s425 = scalar_lea.vmem %s0, %s424
        $region68: #{tpu_custom_call.1} parent=63 // pred_fallthru
          _
        // Predicated region
        $region69: #{tpu_custom_call.1} parent=63 // pred_check
          %p426 = pneg %p70
        $region70: #{tpu_custom_call.1} parent=63 // pred_check_branch
          %428 = sbr.rel (%p426) target = $region72
        $region71: #{tpu_custom_call.1} parent=63 // pred_region
          %p429 = scmp.lt.s32.totalorder %s24, 1
          %s430 = scalar_select %p429, %s24, 1
          %s431 = scalar_lea.vmem %s1, %s430
        $region72: #{tpu_custom_call.1} parent=63 // pred_fallthru
          _
      $region64: #{tpu_custom_call.1} parent=5 // pred_fallthru
        _
      %p432 = scmp.le.s32.totalorder 1, %s24
      %p433 = scmp.lt.s32.totalorder %s24, 3
      %p434 = pnand %p432, %p433
      %p435 = pneg %p434
      // Predicated region
      $region73: #{tpu_custom_call.1} parent=5 // pred_check
        _
      $region74: #{tpu_custom_call.1} parent=5 // pred_check_branch
        %437 = sbr.rel (%p434) target = $region76
      $region75: #{tpu_custom_call.1} parent=5 // pred_region
        %s438 = ssub.s32 %s24, 1
        // Predicated region
        $region77: #{tpu_custom_call.1} parent=75 // pred_check
          %p439 = pneg %p223
        $region78: #{tpu_custom_call.1} parent=75 // pred_check_branch
          %441 = sbr.rel (%p439) target = $region80
        $region79: #{tpu_custom_call.1} parent=75 // pred_region
          %442 = dma.done [#allocation3], 256
        $region80: #{tpu_custom_call.1} parent=75 // pred_fallthru
          _
        %p443 = scmp.lt.s32.totalorder %s29, 1
        %s444 = scalar_select %p443, %s29, 1
        %s445 = smul.addr %s444, 8
        %s446 = scalar_lea.vmem %s0, %s445
        %p447 = pneg %p50
        %p448 = pneg %p47
        %p449 = scmp.lt.s32.totalorder %s29, 1
        %s450 = scalar_select %p449, %s29, 1
        %s451 = scalar_lea.vmem %s1, %s450
        %p452 = pneg %p76
        %p453 = pneg %p73
        %p454 = pneg %p97
        %p455 = pneg %p94
        %p456 = pneg %p118
        %p457 = pneg %p115
        %p458 = pneg %p139
        %p459 = pneg %p136
        %p460 = pneg %p160
        %p461 = pneg %p157
        %p462 = pneg %p181
        %p463 = pneg %p178
        %p464 = pneg %p202
        %p465 = pneg %p199
        %p466 = pneg %p223
        %p467 = pneg %p220
        %p468 = pneg %p244
        %p469 = pneg %p241
        %p470 = pneg %p265
        %p471 = pneg %p262
        %p472 = pneg %p286
        %p473 = pneg %p283
        %p474 = pneg %p307
        %p475 = pneg %p304
        %p476 = pneg %p328
        %p477 = pneg %p325
        %p478 = pneg %p354
        %p479 = pneg %p351
        %s480 = sand.u32 %s341, 1
        %s481 = scalar_lea.sflag [#allocation4], %s480
        %s482 = sand.u32 %s341, 1
        %s483 = smul.addr %s482, 8
        %s484 = scalar_lea.vmem [#allocation5], %s483
        %p485 = scmp.lt.s32.totalorder %s29, 1
        %s486 = scalar_select %p485, %s29, 1
        %s487 = smul.addr %s486, 8
        %s488 = scalar_lea.vmem %s0, %s487
        %p489 = scmp.lt.s32.totalorder %s29, 1
        %s490 = scalar_select %p489, %s29, 1
        %s491 = scalar_lea.vmem %s1, %s490
        %v493 = vld [vmem:[%s488] sm:$0xff]
        %v494 = vld [vmem:[%s491] sm:$0x1]
        %v495 = vpack.c.bf16 %v493, %v493
        %v496 = vld [vmem:[%s2] sm:$0xf]
        %v497 = vld [vmem:[%s2 + $0x4] sm:$0xf]
        %v498 = vld [vmem:[%s2 + $0x8] sm:$0xf]
        %v499 = vld [vmem:[%s2 + $0xc] sm:$0xf]
        %v500 = vld [vmem:[%s3] sm:$0x1]
        %v502 = vlaneseq
        %v503 = vshrl.u32 %v502, 7
        %v504 = vsub.s32 0, %v503
        %v505 = vrot.slane %v500, %v504
        %v511 = vunpack.c.l.b16 %v496
        %v512 = vunpack.c.l.b16 %v497
        %v513 = vunpack.c.l.b16 %v498
        %v514 = vunpack.c.l.b16 %v499
        %v515 = vpack.c.b16 %v512, %v511
        %v516 = vpack.c.b16 %v514, %v513
        %vm519 = vcmask 261120
        %v521 = vsel %vm519, %v495, 0
        %523 = vmatprep.subr.bf16.mxu0 0
        %524 = vmatpush1.bf16.msra.mxu0 %v515
        %525 = vmatprep.subr.bf16.mxu0 0
        %526 = vmatpush1.bf16.msra.mxu0 %v516
        %527 = vmatprep.subr.bf16.mxu0 0
        %528 = vmatpush1.bf16.msra.mxu0 0
        %529 = vmatprep.subr.bf16.mxu0 0
        %530 = vmatpush1.bf16.msra.mxu0 0
        %531 = vmatprep.subr.bf16.mxu0 0
        %532 = vmatpush1.bf16.msra.mxu0 0
        %533 = vmatprep.subr.bf16.mxu0 0
        %534 = vmatpush1.bf16.msra.mxu0 0
        %535 = vmatprep.subr.bf16.mxu0 0
        %536 = vmatpush1.bf16.msra.mxu0 0
        %537 = vmatprep.subr.bf16.mxu0 0
        %538 = vmatpush1.bf16.msra.mxu0 0
        %539 = vmatprep.subr.bf16.mxu0 0
        %540 = vmatpush1.bf16.msra.mxu0 0
        %541 = vmatprep.subr.bf16.mxu0 0
        %542 = vmatpush1.bf16.msra.mxu0 0
        %543 = vmatprep.subr.bf16.mxu0 0
        %544 = vmatpush1.bf16.msra.mxu0 0
        %545 = vmatprep.subr.bf16.mxu0 0
        %546 = vmatpush1.bf16.msra.mxu0 0
        %547 = vmatprep.subr.bf16.mxu0 0
        %548 = vmatpush1.bf16.msra.mxu0 0
        %549 = vmatprep.subr.bf16.mxu0 0
        %550 = vmatpush1.bf16.msra.mxu0 0
        %551 = vmatprep.subr.bf16.mxu0 0
        %552 = vmatpush1.bf16.msra.mxu0 0
        %553 = vmatprep.subr.bf16.mxu0 0
        %554 = vmatpush1.bf16.msra.mxu0 0
        %555 = vmatprep.mubr.bf16.mxu0 0
        %556 = vmatmul.mubr.bf16.gmra.mrb[0].mxu0 %v521
        %v557 = vpop.f32.mrb[0].mxu0
        %v558 = vadd.f32 %v505, %v557
        %v559 = vpop.f32.mrb[0].mxu0
        %v560 = vpop.f32.mrb[0].mxu0
        %v561 = vpop.f32.mrb[0].mxu0
        %562 = vdwg.mxu0
        %v563 = vpack.c.bf16 %v558, %v558
        %565 = vrot.lane.b32.xlu0 %v558, 96
        %v566 = vpop.permute.xlu0 %565
        %568 = vxpose.xlu0.b32.start [1/16] %v566, 128
        %569 = vxpose.xlu0.b32.cont [2/16] 0.0, 128
        %570 = vxpose.xlu0.b32.cont [3/16] 0.0, 128
        %571 = vxpose.xlu0.b32.cont [4/16] 0.0, 128
        %572 = vxpose.xlu0.b32.cont [5/16] 0.0, 128
        %573 = vxpose.xlu0.b32.cont [6/16] 0.0, 128
        %574 = vxpose.xlu0.b32.cont [7/16] 0.0, 128
        %575 = vxpose.xlu0.b32.cont [8/16] 0.0, 128
        %576 = vxpose.xlu0.b32.cont [9/16] 0.0, 128
        %577 = vxpose.xlu0.b32.cont [10/16] 0.0, 128
        %578 = vxpose.xlu0.b32.cont [11/16] 0.0, 128
        %579 = vxpose.xlu0.b32.cont [12/16] 0.0, 128
        %580 = vxpose.xlu0.b32.cont [13/16] 0.0, 128
        %581 = vxpose.xlu0.b32.cont [14/16] 0.0, 128
        %582 = vxpose.xlu0.b32.cont [15/16] 0.0, 128
        %583 = vxpose.xlu0.b32.end [16/16] 0.0, 128
        %v584 = vpop.trf.xlu0
        %v585 = vpop.trf.xlu0
        %v586 = vpop.trf.xlu0
        %v587 = vpop.trf.xlu0
        %v588 = vpop.trf.xlu0
        %v589 = vpop.trf.xlu0
        %v590 = vpop.trf.xlu0
        %v591 = vpop.trf.xlu0
        %v592 = vpop.trf.xlu0
        %v593 = vpop.trf.xlu0
        %v594 = vpop.trf.xlu0
        %v595 = vpop.trf.xlu0
        %v596 = vpop.trf.xlu0
        %v597 = vpop.trf.xlu0
        %v598 = vpop.trf.xlu0
        %v599 = vpop.trf.xlu0
        %v600 = vpack.c.bf16 %v585, %v584
        %vm601 = vcmask 130048
        %v603 = vsel %vm601, %v563, 0
        %605 = vmatprep.subr.bf16.mxu0 0
        %606 = vmatpush1.bf16.msra.mxu0 %v600
        %607 = vmatprep.subr.bf16.mxu0 0
        %608 = vmatpush1.bf16.msra.mxu0 0
        %609 = vmatprep.subr.bf16.mxu0 0
        %610 = vmatpush1.bf16.msra.mxu0 0
        %611 = vmatprep.subr.bf16.mxu0 0
        %612 = vmatpush1.bf16.msra.mxu0 0
        %613 = vmatprep.subr.bf16.mxu0 0
        %614 = vmatpush1.bf16.msra.mxu0 0
        %615 = vmatprep.subr.bf16.mxu0 0
        %616 = vmatpush1.bf16.msra.mxu0 0
        %617 = vmatprep.subr.bf16.mxu0 0
        %618 = vmatpush1.bf16.msra.mxu0 0
        %619 = vmatprep.subr.bf16.mxu0 0
        %620 = vmatpush1.bf16.msra.mxu0 0
        %621 = vmatprep.subr.bf16.mxu0 0
        %622 = vmatpush1.bf16.msra.mxu0 0
        %623 = vmatprep.subr.bf16.mxu0 0
        %624 = vmatpush1.bf16.msra.mxu0 0
        %625 = vmatprep.subr.bf16.mxu0 0
        %626 = vmatpush1.bf16.msra.mxu0 0
        %627 = vmatprep.subr.bf16.mxu0 0
        %628 = vmatpush1.bf16.msra.mxu0 0
        %629 = vmatprep.subr.bf16.mxu0 0
        %630 = vmatpush1.bf16.msra.mxu0 0
        %631 = vmatprep.subr.bf16.mxu0 0
        %632 = vmatpush1.bf16.msra.mxu0 0
        %633 = vmatprep.subr.bf16.mxu0 0
        %634 = vmatpush1.bf16.msra.mxu0 0
        %635 = vmatprep.subr.bf16.mxu0 0
        %636 = vmatpush1.bf16.msra.mxu0 0
        %637 = vmatprep.mubr.bf16.mxu0 0
        %638 = vmatmul.mubr.bf16.gmra.mrb[0].mxu0 %v603
        %v639 = vpop.f32.mrb[0].mxu0
        %v640 = vadd.f32 0.0, %v639
        %v641 = vpop.f32.mrb[0].mxu0
        %v642 = vpop.f32.mrb[0].mxu0
        %v643 = vpop.f32.mrb[0].mxu0
        %644 = vdwg.mxu0
        %v645 = vmul.f32 %v640, 0.25
        %v647 = vlaneseq
        %v648 = vshrl.u32 %v647, 7
        %v649 = vsub.s32 0, %v648
        %v650 = vrot.slane %v494, %v649
        %v652 = vadd.f32 %v645, %v650
        %vm653 = vcmask 64512
        %v654 = vsel %vm653, %v652, -inf
        %655 = vmax.xlane.f32.xlu0 %v654
        %v656 = vpop.xlane.xlu0 %655
        %v657 = vsub.f32 %v652, %v656
        %v658 = vmul.f32 %v657, 1.442695
        %v659 = vpow.pop %v658
        %v660 = vsel %vm653, %v659, 0.0
        %661 = vadd.xlane.f32.xlu0 %v660
        %v662 = vpop.xlane.xlu0 %661
        %v663 = vrcp.pop %v662
        %v664 = vmul.f32 %v659, %v663
        %v665 = vpack.c.bf16 %v664, %v664
        %667 = vrot.lane.b32.xlu0 %v563, 64
        %v668 = vpop.permute.xlu0 %667
        %v670 = vsel %vm653, %v665, 0
        %vm672 = vcmask 1043456
        %v674 = vsel %vm672, %v668, 0
        %676 = vmatprep.subr.bf16.mxu0 0
        %677 = vmatpush1.bf16.msra.mxu0 %v674
        %678 = vmatprep.subr.bf16.mxu0 0
        %679 = vmatpush1.bf16.msra.mxu0 0
        %680 = vmatprep.subr.bf16.mxu0 0
        %681 = vmatpush1.bf16.msra.mxu0 0
        %682 = vmatprep.subr.bf16.mxu0 0
        %683 = vmatpush1.bf16.msra.mxu0 0
        %684 = vmatprep.subr.bf16.mxu0 0
        %685 = vmatpush1.bf16.msra.mxu0 0
        %686 = vmatprep.subr.bf16.mxu0 0
        %687 = vmatpush1.bf16.msra.mxu0 0
        %688 = vmatprep.subr.bf16.mxu0 0
        %689 = vmatpush1.bf16.msra.mxu0 0
        %690 = vmatprep.subr.bf16.mxu0 0
        %691 = vmatpush1.bf16.msra.mxu0 0
        %692 = vmatprep.subr.bf16.mxu0 0
        %693 = vmatpush1.bf16.msra.mxu0 0
        %694 = vmatprep.subr.bf16.mxu0 0
        %695 = vmatpush1.bf16.msra.mxu0 0
        %696 = vmatprep.subr.bf16.mxu0 0
        %697 = vmatpush1.bf16.msra.mxu0 0
        %698 = vmatprep.subr.bf16.mxu0 0
        %699 = vmatpush1.bf16.msra.mxu0 0
        %700 = vmatprep.subr.bf16.mxu0 0
        %701 = vmatpush1.bf16.msra.mxu0 0
        %702 = vmatprep.subr.bf16.mxu0 0
        %703 = vmatpush1.bf16.msra.mxu0 0
        %704 = vmatprep.subr.bf16.mxu0 0
        %705 = vmatpush1.bf16.msra.mxu0 0
        %706 = vmatprep.subr.bf16.mxu0 0
        %707 = vmatpush1.bf16.msra.mxu0 0
        %708 = vmatprep.mubr.bf16.mxu0 0
        %709 = vmatmul.mubr.bf16.gmra.mrb[0].mxu0 %v670
        %v710 = vpop.f32.mrb[0].mxu0
        %v711 = vadd.f32 0.0, %v710
        %v712 = vpop.f32.mrb[0].mxu0
        %v713 = vpop.f32.mrb[0].mxu0
        %v714 = vpop.f32.mrb[0].mxu0
        %715 = vdwg.mxu0
        %v716 = vpack.c.bf16 %v711, %v711
        %v717 = vld [vmem:[%s4] sm:$0xf]
        %v718 = vld [vmem:[%s4 + $0x4] sm:$0xf]
        %719 = vrot.lane.b32.xlu0 %v558, 80
        %v720 = vpop.permute.xlu0 %719
        %722 = vxpose.xlu0.b32.start [1/16] %v720, 128
        %723 = vxpose.xlu0.b32.cont [2/16] 0.0, 128
        %724 = vxpose.xlu0.b32.cont [3/16] 0.0, 128
        %725 = vxpose.xlu0.b32.cont [4/16] 0.0, 128
        %726 = vxpose.xlu0.b32.cont [5/16] 0.0, 128
        %727 = vxpose.xlu0.b32.cont [6/16] 0.0, 128
        %728 = vxpose.xlu0.b32.cont [7/16] 0.0, 128
        %729 = vxpose.xlu0.b32.cont [8/16] 0.0, 128
        %730 = vxpose.xlu0.b32.cont [9/16] 0.0, 128
        %731 = vxpose.xlu0.b32.cont [10/16] 0.0, 128
        %732 = vxpose.xlu0.b32.cont [11/16] 0.0, 128
        %733 = vxpose.xlu0.b32.cont [12/16] 0.0, 128
        %734 = vxpose.xlu0.b32.cont [13/16] 0.0, 128
        %735 = vxpose.xlu0.b32.cont [14/16] 0.0, 128
        %736 = vxpose.xlu0.b32.cont [15/16] 0.0, 128
        %737 = vxpose.xlu0.b32.end [16/16] 0.0, 128
        %v738 = vpop.trf.xlu0
        %v739 = vpop.trf.xlu0
        %v740 = vpop.trf.xlu0
        %v741 = vpop.trf.xlu0
        %v742 = vpop.trf.xlu0
        %v743 = vpop.trf.xlu0
        %v744 = vpop.trf.xlu0
        %v745 = vpop.trf.xlu0
        %v746 = vpop.trf.xlu0
        %v747 = vpop.trf.xlu0
        %v748 = vpop.trf.xlu0
        %v749 = vpop.trf.xlu0
        %v750 = vpop.trf.xlu0
        %v751 = vpop.trf.xlu0
        %v752 = vpop.trf.xlu0
        %v753 = vpop.trf.xlu0
        %v754 = vpack.c.bf16 %v739, %v738
        %755 = vrot.lane.b32.xlu0 %v563, 112
        %v756 = vpop.permute.xlu0 %755
        %v758 = vsel %vm601, %v756, 0
        %760 = vmatprep.subr.bf16.mxu0 0
        %761 = vmatpush1.bf16.msra.mxu0 %v754
        %762 = vmatprep.subr.bf16.mxu0 0
        %763 = vmatpush1.bf16.msra.mxu0 0
        %764 = vmatprep.subr.bf16.mxu0 0
        %765 = vmatpush1.bf16.msra.mxu0 0
        %766 = vmatprep.subr.bf16.mxu0 0
        %767 = vmatpush1.bf16.msra.mxu0 0
        %768 = vmatprep.subr.bf16.mxu0 0
        %769 = vmatpush1.bf16.msra.mxu0 0
        %770 = vmatprep.subr.bf16.mxu0 0
        %771 = vmatpush1.bf16.msra.mxu0 0
        %772 = vmatprep.subr.bf16.mxu0 0
        %773 = vmatpush1.bf16.msra.mxu0 0
        %774 = vmatprep.subr.bf16.mxu0 0
        %775 = vmatpush1.bf16.msra.mxu0 0
        %776 = vmatprep.subr.bf16.mxu0 0
        %777 = vmatpush1.bf16.msra.mxu0 0
        %778 = vmatprep.subr.bf16.mxu0 0
        %779 = vmatpush1.bf16.msra.mxu0 0
        %780 = vmatprep.subr.bf16.mxu0 0
        %781 = vmatpush1.bf16.msra.mxu0 0
        %782 = vmatprep.subr.bf16.mxu0 0
        %783 = vmatpush1.bf16.msra.mxu0 0
        %784 = vmatprep.subr.bf16.mxu0 0
        %785 = vmatpush1.bf16.msra.mxu0 0
        %786 = vmatprep.subr.bf16.mxu0 0
        %787 = vmatpush1.bf16.msra.mxu0 0
        %788 = vmatprep.subr.bf16.mxu0 0
        %789 = vmatpush1.bf16.msra.mxu0 0
        %790 = vmatprep.subr.bf16.mxu0 0
        %791 = vmatpush1.bf16.msra.mxu0 0
        %792 = vmatprep.mubr.bf16.mxu0 0
        %793 = vmatmul.mubr.bf16.gmra.mrb[0].mxu0 %v758
        %v794 = vpop.f32.mrb[0].mxu0
        %v795 = vadd.f32 0.0, %v794
        %v796 = vpop.f32.mrb[0].mxu0
        %v797 = vpop.f32.mrb[0].mxu0
        %v798 = vpop.f32.mrb[0].mxu0
        %799 = vdwg.mxu0
        %v800 = vmul.f32 %v795, 0.25
        %v801 = vadd.f32 %v800, %v650
        %v802 = vsel %vm653, %v801, -inf
        %803 = vmax.xlane.f32.xlu0 %v802
        %v804 = vpop.xlane.xlu0 %803
        %v805 = vsub.f32 %v801, %v804
        %v806 = vmul.f32 %v805, 1.442695
        %v807 = vpow.pop %v806
        %v808 = vsel %vm653, %v807, 0.0
        %809 = vadd.xlane.f32.xlu0 %v808
        %v810 = vpop.xlane.xlu0 %809
        %v811 = vrcp.pop %v810
        %v812 = vmul.f32 %v807, %v811
        %v813 = vpack.c.bf16 %v812, %v812
        %814 = vrot.lane.b32.xlu0 %v563, 48
        %v815 = vpop.permute.xlu0 %814
        %v817 = vsel %vm653, %v813, 0
        %v820 = vsel %vm672, %v815, 0
        %822 = vmatprep.subr.bf16.mxu0 0
        %823 = vmatpush1.bf16.msra.mxu0 %v820
        %824 = vmatprep.subr.bf16.mxu0 0
        %825 = vmatpush1.bf16.msra.mxu0 0
        %826 = vmatprep.subr.bf16.mxu0 0
        %827 = vmatpush1.bf16.msra.mxu0 0
        %828 = vmatprep.subr.bf16.mxu0 0
        %829 = vmatpush1.bf16.msra.mxu0 0
        %830 = vmatprep.subr.bf16.mxu0 0
        %831 = vmatpush1.bf16.msra.mxu0 0
        %832 = vmatprep.subr.bf16.mxu0 0
        %833 = vmatpush1.bf16.msra.mxu0 0
        %834 = vmatprep.subr.bf16.mxu0 0
        %835 = vmatpush1.bf16.msra.mxu0 0
        %836 = vmatprep.subr.bf16.mxu0 0
        %837 = vmatpush1.bf16.msra.mxu0 0
        %838 = vmatprep.subr.bf16.mxu0 0
        %839 = vmatpush1.bf16.msra.mxu0 0
        %840 = vmatprep.subr.bf16.mxu0 0
        %841 = vmatpush1.bf16.msra.mxu0 0
        %842 = vmatprep.subr.bf16.mxu0 0
        %843 = vmatpush1.bf16.msra.mxu0 0
        %844 = vmatprep.subr.bf16.mxu0 0
        %845 = vmatpush1.bf16.msra.mxu0 0
        %846 = vmatprep.subr.bf16.mxu0 0
        %847 = vmatpush1.bf16.msra.mxu0 0
        %848 = vmatprep.subr.bf16.mxu0 0
        %849 = vmatpush1.bf16.msra.mxu0 0
        %850 = vmatprep.subr.bf16.mxu0 0
        %851 = vmatpush1.bf16.msra.mxu0 0
        %852 = vmatprep.subr.bf16.mxu0 0
        %853 = vmatpush1.bf16.msra.mxu0 0
        %854 = vmatprep.mubr.bf16.mxu0 0
        %855 = vmatmul.mubr.bf16.gmra.mrb[0].mxu0 %v817
        %v856 = vpop.f32.mrb[0].mxu0
        %v857 = vadd.f32 0.0, %v856
        %v858 = vpop.f32.mrb[0].mxu0
        %v859 = vpop.f32.mrb[0].mxu0
        %v860 = vpop.f32.mrb[0].mxu0
        %861 = vdwg.mxu0
        %v862 = vpack.c.bf16 %v857, %v857
        %s863 = scalar_lea.vmem %s4, 8
        %v864 = vld [vmem:[%s863] sm:$0xf]
        %v865 = vld [vmem:[%s863 + $0x4] sm:$0xf]
        %v868 = vunpack.c.l.b16 %v864
        %v869 = vunpack.c.l.b16 %v865
        %v870 = vpack.c.b16 %v869, %v868
        %v873 = vsel %vm601, %v862, 0
        %875 = vmatprep.subr.bf16.mxu0 0
        %876 = vmatpush1.bf16.msra.mxu0 %v870
        %877 = vmatprep.subr.bf16.mxu0 0
        %878 = vmatpush1.bf16.msra.mxu0 0
        %879 = vmatprep.subr.bf16.mxu0 0
        %880 = vmatpush1.bf16.msra.mxu0 0
        %881 = vmatprep.subr.bf16.mxu0 0
        %882 = vmatpush1.bf16.msra.mxu0 0
        %883 = vmatprep.subr.bf16.mxu0 0
        %884 = vmatpush1.bf16.msra.mxu0 0
        %885 = vmatprep.subr.bf16.mxu0 0
        %886 = vmatpush1.bf16.msra.mxu0 0
        %887 = vmatprep.subr.bf16.mxu0 0
        %888 = vmatpush1.bf16.msra.mxu0 0
        %889 = vmatprep.subr.bf16.mxu0 0
        %890 = vmatpush1.bf16.msra.mxu0 0
        %891 = vmatprep.subr.bf16.mxu0 0
        %892 = vmatpush1.bf16.msra.mxu0 0
        %893 = vmatprep.subr.bf16.mxu0 0
        %894 = vmatpush1.bf16.msra.mxu0 0
        %895 = vmatprep.subr.bf16.mxu0 0
        %896 = vmatpush1.bf16.msra.mxu0 0
        %897 = vmatprep.subr.bf16.mxu0 0
        %898 = vmatpush1.bf16.msra.mxu0 0
        %899 = vmatprep.subr.bf16.mxu0 0
        %900 = vmatpush1.bf16.msra.mxu0 0
        %901 = vmatprep.subr.bf16.mxu0 0
        %902 = vmatpush1.bf16.msra.mxu0 0
        %903 = vmatprep.subr.bf16.mxu0 0
        %904 = vmatpush1.bf16.msra.mxu0 0
        %905 = vmatprep.subr.bf16.mxu0 0
        %906 = vmatpush1.bf16.msra.mxu0 0
        %907 = vmatprep.mubr.bf16.mxu0 0
        %908 = vmatmul.mubr.bf16.gmra.mrb[0].mxu0 %v873
        %v909 = vpop.f32.mrb[0].mxu0
        %v910 = vadd.f32 0.0, %v909
        %v911 = vpop.f32.mrb[0].mxu0
        %v912 = vpop.f32.mrb[0].mxu0
        %v913 = vpop.f32.mrb[0].mxu0
        %914 = vdwg.mxu0
        %v917 = vunpack.c.l.b16 %v717
        %v918 = vunpack.c.l.b16 %v718
        %v919 = vpack.c.b16 %v918, %v917
        %v922 = vsel %vm601, %v716, 0
        %924 = vmatprep.subr.bf16.mxu0 0
        %925 = vmatpush1.bf16.msra.mxu0 %v919
        %926 = vmatprep.subr.bf16.mxu0 0
        %927 = vmatpush1.bf16.msra.mxu0 0
        %928 = vmatprep.subr.bf16.mxu0 0
        %929 = vmatpush1.bf16.msra.mxu0 0
        %930 = vmatprep.subr.bf16.mxu0 0
        %931 = vmatpush1.bf16.msra.mxu0 0
        %932 = vmatprep.subr.bf16.mxu0 0
        %933 = vmatpush1.bf16.msra.mxu0 0
        %934 = vmatprep.subr.bf16.mxu0 0
        %935 = vmatpush1.bf16.msra.mxu0 0
        %936 = vmatprep.subr.bf16.mxu0 0
        %937 = vmatpush1.bf16.msra.mxu0 0
        %938 = vmatprep.subr.bf16.mxu0 0
        %939 = vmatpush1.bf16.msra.mxu0 0
        %940 = vmatprep.subr.bf16.mxu0 0
        %941 = vmatpush1.bf16.msra.mxu0 0
        %942 = vmatprep.subr.bf16.mxu0 0
        %943 = vmatpush1.bf16.msra.mxu0 0
        %944 = vmatprep.subr.bf16.mxu0 0
        %945 = vmatpush1.bf16.msra.mxu0 0
        %946 = vmatprep.subr.bf16.mxu0 0
        %947 = vmatpush1.bf16.msra.mxu0 0
        %948 = vmatprep.subr.bf16.mxu0 0
        %949 = vmatpush1.bf16.msra.mxu0 0
        %950 = vmatprep.subr.bf16.mxu0 0
        %951 = vmatpush1.bf16.msra.mxu0 0
        %952 = vmatprep.subr.bf16.mxu0 0
        %953 = vmatpush1.bf16.msra.mxu0 0
        %954 = vmatprep.subr.bf16.mxu0 0
        %955 = vmatpush1.bf16.msra.mxu0 0
        %956 = vmatprep.mubr.bf16.mxu0 0
        %957 = vmatmul.mubr.bf16.gmra.mrb[0].mxu0 %v922
        %v958 = vpop.f32.mrb[0].mxu0
        %v959 = vadd.f32 %v910, %v958
        %v960 = vpop.f32.mrb[0].mxu0
        %v961 = vpop.f32.mrb[0].mxu0
        %v962 = vpop.f32.mrb[0].mxu0
        %963 = vdwg.mxu0
        %v964 = vld [vmem:[%s5] sm:$0x1]
        %v966 = vlaneseq
        %v967 = vshrl.u32 %v966, 7
        %v968 = vsub.s32 0, %v967
        %v969 = vrot.slane %v964, %v968
        %v971 = vadd.f32 %v959, %v969
        %v972 = vadd.f32 %v493, %v971
        %v973 = vld [vmem:[%s6] sm:$0x1]
        %v974 = vld [vmem:[%s7] sm:$0x1]
        %v975 = vsel %vm519, %v972, 0.0
        %976 = vadd.xlane.f32.xlu0 %v975
        %v977 = vpop.xlane.xlu0 %976
        %v978 = vrcp.pop 32.0
        %v979 = vmul.f32 %v977, %v978
        %v980 = vsub.f32 %v972, %v979
        %v981 = vmul.f32 %v980, %v980
        %v982 = vsel %vm519, %v981, 0.0
        %983 = vadd.xlane.f32.xlu0 %v982
        %v984 = vpop.xlane.xlu0 %983
        %v985 = vmul.f32 %v984, %v978
        %v986 = vadd.f32 %v985, 1e-05
        %v987 = vrsqrt.pop %v986
        %v988 = vmul.f32 %v980, %v987
        %v990 = vlaneseq
        %v991 = vshrl.u32 %v990, 7
        %v992 = vsub.s32 0, %v991
        %v993 = vrot.slane %v973, %v992
        %v995 = vmul.f32 %v988, %v993
        %v997 = vlaneseq
        %v998 = vshrl.u32 %v997, 7
        %v999 = vsub.s32 0, %v998
        %v1000 = vrot.slane %v974, %v999
        %v1002 = vadd.f32 %v995, %v1000
        %v1003 = vpack.c.bf16 %v1002, %v1002
        %v1004 = vld [vmem:[#allocation2] sm:$0xf]
        %v1005 = vld [vmem:[#allocation2 + $0x4] sm:$0xf]
        %v1006 = vld [vmem:[#allocation2 + $0x8] sm:$0xf]
        %v1007 = vld [vmem:[#allocation2 + $0xc] sm:$0xf]
        %v1008 = vld [vmem:[%s9] sm:$0x1]
        %v1010 = vlaneseq
        %v1011 = vshrl.u32 %v1010, 7
        %v1012 = vsub.s32 0, %v1011
        %v1013 = vrot.slane %v1008, %v1012
        %v1019 = vunpack.c.l.b16 %v1004
        %v1020 = vunpack.c.l.b16 %v1005
        %v1021 = vunpack.c.l.b16 %v1006
        %v1022 = vunpack.c.l.b16 %v1007
        %v1023 = vpack.c.b16 %v1020, %v1019
        %v1024 = vpack.c.b16 %v1022, %v1021
        %v1028 = vsel %vm519, %v1003, 0
        %1030 = vmatprep.subr.bf16.mxu0 0
        %1031 = vmatpush1.bf16.msra.mxu0 %v1023
        %1032 = vmatprep.subr.bf16.mxu0 0
        %1033 = vmatpush1.bf16.msra.mxu0 %v1024
        %1034 = vmatprep.subr.bf16.mxu0 0
        %1035 = vmatpush1.bf16.msra.mxu0 0
        %1036 = vmatprep.subr.bf16.mxu0 0
        %1037 = vmatpush1.bf16.msra.mxu0 0
        %1038 = vmatprep.subr.bf16.mxu0 0
        %1039 = vmatpush1.bf16.msra.mxu0 0
        %1040 = vmatprep.subr.bf16.mxu0 0
        %1041 = vmatpush1.bf16.msra.mxu0 0
        %1042 = vmatprep.subr.bf16.mxu0 0
        %1043 = vmatpush1.bf16.msra.mxu0 0
        %1044 = vmatprep.subr.bf16.mxu0 0
        %1045 = vmatpush1.bf16.msra.mxu0 0
        %1046 = vmatprep.subr.bf16.mxu0 0
        %1047 = vmatpush1.bf16.msra.mxu0 0
        %1048 = vmatprep.subr.bf16.mxu0 0
        %1049 = vmatpush1.bf16.msra.mxu0 0
        %1050 = vmatprep.subr.bf16.mxu0 0
        %1051 = vmatpush1.bf16.msra.mxu0 0
        %1052 = vmatprep.subr.bf16.mxu0 0
        %1053 = vmatpush1.bf16.msra.mxu0 0
        %1054 = vmatprep.subr.bf16.mxu0 0
        %1055 = vmatpush1.bf16.msra.mxu0 0
        %1056 = vmatprep.subr.bf16.mxu0 0
        %1057 = vmatpush1.bf16.msra.mxu0 0
        %1058 = vmatprep.subr.bf16.mxu0 0
        %1059 = vmatpush1.bf16.msra.mxu0 0
        %1060 = vmatprep.subr.bf16.mxu0 0
        %1061 = vmatpush1.bf16.msra.mxu0 0
        %1062 = vmatprep.mubr.bf16.mxu0 0
        %1063 = vmatmul.mubr.bf16.gmra.mrb[0].mxu0 %v1028
        %v1064 = vpop.f32.mrb[0].mxu0
        %v1065 = vadd.f32 %v1013, %v1064
        %v1066 = vpop.f32.mrb[0].mxu0
        %v1067 = vpop.f32.mrb[0].mxu0
        %v1068 = vpop.f32.mrb[0].mxu0
        %1069 = vdwg.mxu0
        %v1070 = vmax.f32 %v1065, 0.0
        %v1071 = vpack.c.bf16 %v1070, %v1070
        %v1072 = vld [vmem:[%s10] sm:$0xf]
        %v1073 = vld [vmem:[%s10 + $0x4] sm:$0xf]
        %v1074 = vld [vmem:[%s10 + $0x8] sm:$0xf]
        %v1075 = vld [vmem:[%s10 + $0xc] sm:$0xf]
        %v1076 = vld [vmem:[%s10 + $0x10] sm:$0xf]
        %v1077 = vld [vmem:[%s10 + $0x14] sm:$0xf]
        %v1078 = vld [vmem:[%s10 + $0x18] sm:$0xf]
        %v1079 = vld [vmem:[%s10 + $0x1c] sm:$0xf]
        %v1080 = vld [vmem:[%s11] sm:$0x1]
        %v1082 = vlaneseq
        %v1083 = vshrl.u32 %v1082, 7
        %v1084 = vsub.s32 0, %v1083
        %v1085 = vrot.slane %v1080, %v1084
        %v1095 = vunpack.c.l.b16 %v1072
        %v1096 = vunpack.c.l.b16 %v1073
        %v1097 = vunpack.c.l.b16 %v1074
        %v1098 = vunpack.c.l.b16 %v1075
        %v1099 = vunpack.c.l.b16 %v1076
        %v1100 = vunpack.c.l.b16 %v1077
        %v1101 = vunpack.c.l.b16 %v1078
        %v1102 = vunpack.c.l.b16 %v1079
        %v1103 = vpack.c.b16 %v1096, %v1095
        %v1104 = vpack.c.b16 %v1098, %v1097
        %v1105 = vpack.c.b16 %v1100, %v1099
        %v1106 = vpack.c.b16 %v1102, %v1101
        %vm1111 = vcmask 523264
        %v1113 = vsel %vm1111, %v1071, 0
        %1115 = vmatprep.subr.bf16.mxu0 0
        %1116 = vmatpush1.bf16.msra.mxu0 %v1103
        %1117 = vmatprep.subr.bf16.mxu0 0
        %1118 = vmatpush1.bf16.msra.mxu0 %v1104
        %1119 = vmatprep.subr.bf16.mxu0 0
        %1120 = vmatpush1.bf16.msra.mxu0 %v1105
        %1121 = vmatprep.subr.bf16.mxu0 0
        %1122 = vmatpush1.bf16.msra.mxu0 %v1106
        %1123 = vmatprep.subr.bf16.mxu0 0
        %1124 = vmatpush1.bf16.msra.mxu0 0
        %1125 = vmatprep.subr.bf16.mxu0 0
        %1126 = vmatpush1.bf16.msra.mxu0 0
        %1127 = vmatprep.subr.bf16.mxu0 0
        %1128 = vmatpush1.bf16.msra.mxu0 0
        %1129 = vmatprep.subr.bf16.mxu0 0
        %1130 = vmatpush1.bf16.msra.mxu0 0
        %1131 = vmatprep.subr.bf16.mxu0 0
        %1132 = vmatpush1.bf16.msra.mxu0 0
        %1133 = vmatprep.subr.bf16.mxu0 0
        %1134 = vmatpush1.bf16.msra.mxu0 0
        %1135 = vmatprep.subr.bf16.mxu0 0
        %1136 = vmatpush1.bf16.msra.mxu0 0
        %1137 = vmatprep.subr.bf16.mxu0 0
        %1138 = vmatpush1.bf16.msra.mxu0 0
        %1139 = vmatprep.subr.bf16.mxu0 0
        %1140 = vmatpush1.bf16.msra.mxu0 0
        %1141 = vmatprep.subr.bf16.mxu0 0
        %1142 = vmatpush1.bf16.msra.mxu0 0
        %1143 = vmatprep.subr.bf16.mxu0 0
        %1144 = vmatpush1.bf16.msra.mxu0 0
        %1145 = vmatprep.subr.bf16.mxu0 0
        %1146 = vmatpush1.bf16.msra.mxu0 0
        %1147 = vmatprep.mubr.bf16.mxu0 0
        %1148 = vmatmul.mubr.bf16.gmra.mrb[0].mxu0 %v1113
        %v1149 = vpop.f32.mrb[0].mxu0
        %v1150 = vadd.f32 %v1085, %v1149
        %v1151 = vpop.f32.mrb[0].mxu0
        %v1152 = vpop.f32.mrb[0].mxu0
        %v1153 = vpop.f32.mrb[0].mxu0
        %1154 = vdwg.mxu0
        %v1155 = vadd.f32 %v1002, %v1150
        %v1156 = vld [vmem:[%s12] sm:$0x1]
        %v1157 = vld [vmem:[%s13] sm:$0x1]
        %v1158 = vsel %vm519, %v1155, 0.0
        %1159 = vadd.xlane.f32.xlu0 %v1158
        %v1160 = vpop.xlane.xlu0 %1159
        %v1161 = vmul.f32 %v1160, %v978
        %v1162 = vsub.f32 %v1155, %v1161
        %v1163 = vmul.f32 %v1162, %v1162
        %v1164 = vsel %vm519, %v1163, 0.0
        %1165 = vadd.xlane.f32.xlu0 %v1164
        %v1166 = vpop.xlane.xlu0 %1165
        %v1167 = vmul.f32 %v1166, %v978
        %v1168 = vadd.f32 %v1167, 1e-05
        %v1169 = vrsqrt.pop %v1168
        %v1170 = vmul.f32 %v1162, %v1169
        %v1172 = vlaneseq
        %v1173 = vshrl.u32 %v1172, 7
        %v1174 = vsub.s32 0, %v1173
        %v1175 = vrot.slane %v1156, %v1174
        %v1177 = vmul.f32 %v1170, %v1175
        %v1179 = vlaneseq
        %v1180 = vshrl.u32 %v1179, 7
        %v1181 = vsub.s32 0, %v1180
        %v1182 = vrot.slane %v1157, %v1181
        %v1184 = vadd.f32 %v1177, %v1182
        %1185 = vst.msk [vmem:[%s484] sm:$0xff] %vm519, %v1184
        %s1186 = sand.u32 %s341, 1
        %s1187 = scalar_lea.sflag [#allocation4], %s1186
        %s1188 = sand.u32 %s341, 1
        %s1189 = smul.addr %s1188, 8
        %s1190 = scalar_lea.vmem [#allocation5], %s1189
        // Predicated region
        $region81: #{tpu_custom_call.1} parent=75 // pred_check
          %p1191 = pneg %p351
        $region82: #{tpu_custom_call.1} parent=75 // pred_check_branch
          %1193 = sbr.rel (%p1191) target = $region84
        $region83: #{tpu_custom_call.1} parent=75 // pred_region
          %s1195 = ssub.s32 128, 128
          %1196 = vsyncadd %s1187, %s1195
          %s1197 = smul.addr %s29, 128
          %s1198 = scalar_lea.hbm %s14, %s1197
          %s1200 = sshll.u32 %s1190, 4
          %s1201 = int_to_ptr.vmem [resolvable:$true] %s1200
          %1203 = dma.vmem_to_hbm [thread:$0]  %s1201, 128, %s1198, %s1187
        $region84: #{tpu_custom_call.1} parent=75 // pred_fallthru
          _
      $region76: #{tpu_custom_call.1} parent=5 // pred_fallthru
        _
      %p1204 = scmp.le.s32.totalorder 2, %s24
      // Predicated region
      $region85: #{tpu_custom_call.1} parent=5 // pred_check
        %p1205 = pneg %p1204
      $region86: #{tpu_custom_call.1} parent=5 // pred_check_branch
        %1207 = sbr.rel (%p1205) target = $region88
      $region87: #{tpu_custom_call.1} parent=5 // pred_region
        %s1208 = ssub.s32 %s24, 2
        // Predicated region
        $region89: #{tpu_custom_call.1} parent=87 // pred_check
          %p1209 = pneg %p357
        $region90: #{tpu_custom_call.1} parent=87 // pred_check_branch
          %1211 = sbr.rel (%p1209) target = $region92
        $region91: #{tpu_custom_call.1} parent=87 // pred_region
          %s1212 = sand.u32 %s342, 1
          %s1213 = scalar_lea.sflag [#allocation4], %s1212
          %s1214 = sand.u32 %s342, 1
          %s1215 = smul.addr %s1214, 8
          %s1216 = scalar_lea.vmem [#allocation5], %s1215
          %1217 = dma.done %s1213, 128
        $region92: #{tpu_custom_call.1} parent=87 // pred_fallthru
          _
      $region88: #{tpu_custom_call.1} parent=5 // pred_fallthru
        _
    $region6: #{tpu_custom_call.1} parent=1 // loop_footer
      %s28 = sadd.s32 1, %s24
    $region7: #{tpu_custom_call.1} parent=1 // loop_footer_branch
      %23 = sbr.rel target = $region3
    $region8: #{tpu_custom_call.1} parent=1 // loop_exit
      _
    %1218 = vsyncpa [#allocation3], 1
    %s1219 = scalar_lea.sflag [#allocation3], 1
    %1220 = vsyncpa %s1219, 1
    %1221 = vsyncpa [#allocation4], 1
    %s1222 = scalar_lea.sflag [#allocation4], 1
    %1223 = vsyncpa %s1222, 1

</llo_original>
